<compile_context>
chip_gen: v7x
topology: tpu7x:2x2x1
jax: 0.10.0
libtpu: 0.0.40
codegen_flags: <defaults>
</compile_context>

<pallas_src>
import functools

import jax
import jax.numpy as jnp
from jax.experimental import pallas as pl
from jax.experimental.pallas import tpu as pltpu

_LANE = 128
_SUBLANE = 8


def _round_up(x, m):
    return ((x + m - 1) // m) * m


def _bottleneck_kernel(x_ref, w1_ref, b1_ref, w2_ref, b2_ref, g_ref, bt_ref,
                       o_ref, *scratch, eps, d_actual, d_pad, n_h):
    """One (tm, d_pad) row tile. Grid axis 1 tiles the hidden dim (n_h steps);
    the residual + LayerNorm epilogue runs on the last hidden step."""
    # Load x once; bf16 operands feed the MXU, the f32 view feeds the residual.
    xv = x_ref[...]
    x_mm = xv.astype(jnp.bfloat16)

    # bottle_neck_1 + relu  (bf16 x bf16 -> f32 accumulate on the MXU)
    h = jnp.dot(x_mm, w1_ref[...], preferred_element_type=jnp.float32)
    h = jnp.maximum(h + b1_ref[...], 0.0)
    # partial bottle_neck_2 contribution for this hidden-dim tile
    contrib = jnp.dot(h.astype(jnp.bfloat16), w2_ref[...],
                      preferred_element_type=jnp.float32)

    def epilogue(o_partial):
        # Residual + LayerNorm over the (possibly lane-padded) feature axis.
        # Padded lanes of x / W2-columns / b2 are exactly zero, so the mean
        # over d_pad equals the mean over d_actual; variance uses a
        # compile-time lane mask so padding never changes the math.
        y = o_partial + b2_ref[...] + xv.astype(jnp.float32)
        inv_d = 1.0 / d_actual
        mean = jnp.sum(y, axis=-1, keepdims=True) * inv_d
        if d_actual != d_pad:
            lane = jax.lax.broadcasted_iota(jnp.int32, (1, d_pad), 1)
            c = jnp.where(lane < d_actual, y - mean, 0.0)
        else:
            c = y - mean
        var = jnp.sum(c * c, axis=-1, keepdims=True) * inv_d
        out = c * jax.lax.rsqrt(var + eps) * g_ref[...] + bt_ref[...]
        o_ref[...] = out.astype(o_ref.dtype)

    if n_h == 1:
        # Whole hidden dim resident: no accumulator scratch needed.
        epilogue(contrib)
    else:
        acc_ref = scratch[0]
        k = pl.program_id(1)

        @pl.when(k == 0)
        def _():
            acc_ref[...] = contrib

        @pl.when(k != 0)
        def _():
            acc_ref[...] += contrib

        @pl.when(k == n_h - 1)
        def _():
            epilogue(acc_ref[...])


def prepare_params(params, mm_dtype=jnp.bfloat16):
    """Pad params to lane multiples and cast the matmul weights ONCE.

    Call at init and reuse the result for every forward call — re-padding and
    re-casting the weights per call is pure wasted HBM traffic.
    """
    w1, b1, w2, b2, gamma, beta = params
    d_features, d_hid = w1.shape
    d_pad = _round_up(d_features, _LANE)
    h_pad = _round_up(d_hid, _LANE)

    def pad2(a, rows, cols):
        if a.shape == (rows, cols):
            return a
        return jnp.pad(a, ((0, rows - a.shape[0]), (0, cols - a.shape[1])))

    def pad1(a, n):
        return a if a.shape[0] == n else jnp.pad(a, (0, n - a.shape[0]))

    return dict(
        w1=pad2(w1, d_pad, h_pad).astype(mm_dtype),
        w2=pad2(w2, h_pad, d_pad).astype(mm_dtype),
        b1=pad1(b1, h_pad).reshape(1, h_pad).astype(jnp.float32),
        b2=pad1(b2, d_pad).reshape(1, d_pad).astype(jnp.float32),
        gamma=pad1(gamma, d_pad).reshape(1, d_pad).astype(jnp.float32),
        beta=pad1(beta, d_pad).reshape(1, d_pad).astype(jnp.float32),
        d_features=d_features, d_hid=d_hid, d_pad=d_pad, h_pad=h_pad,
    )


def _pick_hidden_tile(h_pad, d_pad, budget_bytes):
    """Largest multiple-of-128 tile that exactly divides h_pad and whose
    double-buffered bf16 W1+W2 blocks fit within budget_bytes."""
    q = h_pad // _LANE
    best = 1
    for d in range(1, q + 1):
        if q % d == 0 and 2 * d_pad * (d * _LANE) * 2 * 2 <= budget_bytes:
            best = d
    return best * _LANE


def shuffle_bottleneck_forward(features, prepared, mode, *, tm=1024, th=None,
                               eps=1e-5, out_dtype=None):
    """features: [batch, d_features] ('1d') or [batch, n_depth, d_features]
    ('2d'). `prepared` must come from prepare_params()."""
    d_features = prepared["d_features"]
    d_pad = prepared["d_pad"]
    h_pad = prepared["h_pad"]
    orig_dtype = features.dtype
    out_dtype = out_dtype or orig_dtype

    if mode not in ("1d", "2d"):
        # Module's 'else' branch: residual = 0 -> plain LayerNorm(features).
        g = prepared["gamma"][0, :d_features]
        bt = prepared["beta"][0, :d_features]
        y = features.astype(jnp.float32)
        mean = jnp.mean(y, axis=-1, keepdims=True)
        var = jnp.mean((y - mean) ** 2, axis=-1, keepdims=True)
        return ((y - mean) * jax.lax.rsqrt(var + eps) * g + bt).astype(out_dtype)

    orig_shape = features.shape
    x2d = features.reshape(-1, d_features)
    M = x2d.shape[0]
    bpe = jnp.dtype(orig_dtype).itemsize
    out_bpe = jnp.dtype(out_dtype).itemsize

    # Lane padding only when d_features isn't already a multiple of 128 — the
    # extra HBM copy is skipped entirely in the aligned case. Padded lanes are
    # zero, which the LayerNorm mean in the kernel relies on.
    if d_pad != d_features:
        x_in = jnp.pad(x2d, ((0, 0), (0, d_pad - d_features)))
    else:
        x_in = x2d
    # No row padding: grid uses cdiv(M, tm); Pallas clips the boundary tile.

    # --- Per-chip VMEM budget with headroom under the physical cap. ---
    try:
        vmem_limit = min(int(pltpu.get_tpu_info().vmem_capacity_bytes * 0.8),
                         112 * 1024 * 1024)
    except Exception:  # defensive default: v7x per-TC size minus headroom
        vmem_limit = 48 * 1024 * 1024

    # --- Hidden-dim tile: keep the full bf16 W1/W2 resident (single-buffered)
    # when they fit; otherwise tile the reduction over the hidden dim. ---
    full_weight_bytes = 2 * d_pad * h_pad * 2          # W1 + W2, bf16, 1 buf
    if th is None:
        if full_weight_bytes <= vmem_limit // 2:
            th = h_pad
        else:
            th = _pick_hidden_tile(h_pad, d_pad, vmem_limit // 2)
    assert th % _LANE == 0 and h_pad % th == 0, (th, h_pad)
    n_h = h_pad // th
    weights_resident = 2 * d_pad * th * 2 * (1 if n_h == 1 else 2)

    # --- Row tile: as large as the remaining VMEM allows (amortizes the
    # ~0.35 us/grid-step overhead), split into >=2 tiles when possible so both
    # v7x TensorCores get work under dimension_semantics=('parallel', ...). ---
    row_align = max(_SUBLANE, 32 // bpe)
    tm = _round_up(max(int(tm), row_align), row_align)
    vec_bytes = (3 * d_pad + h_pad) * 4 * 2
    avail = max(vmem_limit - weights_resident - vec_bytes, 4 * 1024 * 1024)
    per_row = (2 * d_pad * bpe                    # x block, double-buffered
               + 2 * d_pad * out_bpe              # out block, double-buffered
               + (d_pad * 4 if n_h > 1 else 0))   # f32 accumulator scratch
    tm_cap = max(row_align, (avail // per_row) // row_align * row_align)
    half = _round_up(pl.cdiv(M, 2), row_align)    # ensure >=2 row tiles
    tm = max(row_align, min(tm, tm_cap, half))
    n_m = pl.cdiv(M, tm)

    kernel = functools.partial(_bottleneck_kernel, eps=eps,
                               d_actual=d_features, d_pad=d_pad, n_h=n_h)
    scratch_shapes = [] if n_h == 1 else [pltpu.VMEM((tm, d_pad), jnp.float32)]

    w_reads = 1 if n_h == 1 else n_m
    cost = pl.CostEstimate(
        flops=int(2 * 2 * M * d_pad * h_pad),
        transcendentals=int(M),
        bytes_accessed=int(M * d_pad * (bpe + out_bpe)
                           + w_reads * full_weight_bytes
                           + (3 * d_pad + h_pad) * 4),
    )

    def build(single_buffer_consts):
        # Blocks whose index_map never changes gain nothing from the default
        # 2-deep buffering; Buffered(1) halves their VMEM footprint.
        const = (dict(pipeline_mode=pl.Buffered(1))
                 if single_buffer_consts else {})
        w_mode = const if n_h == 1 else {}   # W1/W2/b1 move when n_h > 1
        in_specs = [
            pl.BlockSpec((tm, d_pad), lambda i, k: (i, 0)),             # x
            pl.BlockSpec((d_pad, th), lambda i, k: (0, k), **w_mode),   # W1
            pl.BlockSpec((1, th), lambda i, k: (0, k), **w_mode),       # b1
            pl.BlockSpec((th, d_pad), lambda i, k: (k, 0), **w_mode),   # W2
            pl.BlockSpec((1, d_pad), lambda i, k: (0, 0), **const),     # b2
            pl.BlockSpec((1, d_pad), lambda i, k: (0, 0), **const),     # gamma
            pl.BlockSpec((1, d_pad), lambda i, k: (0, 0), **const),     # beta
        ]
        return pl.pallas_call(
            kernel,
            out_shape=jax.ShapeDtypeStruct((M, d_pad), out_dtype),
            grid_spec=pltpu.PrefetchScalarGridSpec(
                num_scalar_prefetch=0,
                grid=(n_m, n_h),
                in_specs=in_specs,
                out_specs=pl.BlockSpec((tm, d_pad), lambda i, k: (i, 0)),
                scratch_shapes=scratch_shapes,
            ),
            compiler_params=pltpu.CompilerParams(
                dimension_semantics=("parallel", "arbitrary"),
                vmem_limit_bytes=vmem_limit,
            ),
            cost_estimate=cost,
        )

    args = (x_in, prepared["w1"], prepared["b1"], prepared["w2"],
            prepared["b2"], prepared["gamma"], prepared["beta"])
    try:
        out = build(True)(*args)
    except Exception:
        # Fallback if pipeline_mode=pl.Buffered(1) is rejected by the lowering.
        out = build(False)(*args)

    if d_pad != d_features:          # identity slice skipped when lane-aligned
        out = out[:, :d_features]
    return out.reshape(orig_shape)


def init_params(key, d_features, d_hid):
    """Deterministic xavier-normal weights (matches nn.init.xavier_normal_ stats)."""
    k1, k2, k3, k4 = jax.random.split(key, 4)
    std1 = (2.0 / (d_features + d_hid)) ** 0.5
    std2 = (2.0 / (d_hid + d_features)) ** 0.5
    # stored already transposed for x @ W
    w1 = jax.random.normal(k1, (d_features, d_hid), jnp.float32) * std1
    w2 = jax.random.normal(k2, (d_hid, d_features), jnp.float32) * std2
    b1 = jax.random.normal(k3, (d_hid,), jnp.float32) * 0.01
    b2 = jax.random.normal(k4, (d_features,), jnp.float32) * 0.01
    gamma = jnp.ones((d_features,), jnp.float32)
    beta = jnp.zeros((d_features,), jnp.float32)
    return w1, b1, w2, b2, gamma, beta


def _reference_forward(features, params, eps=1e-5):
    w1, b1, w2, b2, gamma, beta = params
    h = jnp.maximum(features @ w1 + b1, 0.0)
    o = h @ w2 + b2
    y = o + features
    mean = jnp.mean(y, axis=-1, keepdims=True)
    var = jnp.mean((y - mean) ** 2, axis=-1, keepdims=True)
    return (y - mean) / jnp.sqrt(var + eps) * gamma + beta


if __name__ == "__main__":
    key = jax.random.PRNGKey(0)
    k_x, k_p, k_x2, k_p2 = jax.random.split(key, 4)

    # --- Test 1: '2d' mode (Conv1d kernel_size=1 path), small shapes. ---
    batch, n_depth, d_features = 2, 8, 32
    d_hid = d_features                            # module default d_hid
    x = jax.random.normal(k_x, (batch, n_depth, d_features), jnp.float32)
    raw_params = init_params(k_p, d_features, d_hid)
    prepared = prepare_params(raw_params)         # hoisted weight prep (once)
    out = jax.block_until_ready(
        shuffle_bottleneck_forward(x, prepared, mode="2d"))
    ref = _reference_forward(x, raw_params)
    assert out.shape == x.shape
    # bf16 matmul operands (f32 accumulate) -> relaxed tolerance vs f32 ref.
    assert jnp.allclose(out, ref, atol=5e-2, rtol=5e-2), float(
        jnp.max(jnp.abs(out - ref)))

    # --- Test 2: '1d' mode with a forced hidden-dim tiled reduction
    # (exercises the accumulator / pl.when path used when the weights are too
    # large to keep resident, e.g. big d_features on v7x's 64 MiB VMEM). ---
    batch2, d_feat2, d_hid2 = 4, 64, 256
    x2 = jax.random.normal(k_x2, (batch2, d_feat2), jnp.float32)
    raw2 = init_params(k_p2, d_feat2, d_hid2)
    prep2 = prepare_params(raw2)
    out2 = jax.block_until_ready(
        shuffle_bottleneck_forward(x2, prep2, mode="1d", th=128))
    ref2 = _reference_forward(x2, raw2)
    assert out2.shape == x2.shape
    assert jnp.allclose(out2, ref2, atol=5e-2, rtol=5e-2), float(
        jnp.max(jnp.abs(out2 - ref2)))

    # --- Test 3: other mode (residual = 0 -> plain LayerNorm(features)). ---
    out3 = jax.block_until_ready(
        shuffle_bottleneck_forward(x, prepared, mode="none"))
    y = x.astype(jnp.float32)
    mean = jnp.mean(y, -1, keepdims=True)
    var = jnp.mean((y - mean) ** 2, -1, keepdims=True)
    ref3 = (y - mean) / jnp.sqrt(var + 1e-5) * raw_params[4] + raw_params[5]
    assert jnp.allclose(out3, ref3, atol=1e-5, rtol=1e-5)

    print("KERNEL_OK")
</pallas_src>

<mosaic_0001>
module attributes {stable_mosaic.version = 11 : i64} {
  func.func @_bottleneck_kernel(%arg0: i32, %arg1: i32, %arg2: memref<8x128xf32, #tpu.memory_space<vmem>>, %arg3: memref<128x128xbf16, #tpu.memory_space<vmem>>, %arg4: memref<1x128xf32, #tpu.memory_space<vmem>>, %arg5: memref<128x128xbf16, #tpu.memory_space<vmem>>, %arg6: memref<1x128xf32, #tpu.memory_space<vmem>>, %arg7: memref<1x128xf32, #tpu.memory_space<vmem>>, %arg8: memref<1x128xf32, #tpu.memory_space<vmem>>, %arg9: memref<8x128xf32, #tpu.memory_space<vmem>>) attributes {dimension_semantics = [#tpu.dimension_semantics<parallel>, #tpu.dimension_semantics<arbitrary>], iteration_bounds = array<i64: 2, 1>, scalar_prefetch = 0 : i64, scratch_operands = 0 : i64, tpu.core_type = #tpu.core_type<tc>, window_params = [{transform_indices = @transform_0, window_bounds = array<i64: 8, 128>}, {pipeline_mode = #tpu.pipeline_mode<synchronous>, transform_indices = @transform_1, window_bounds = array<i64: 128, 128>}, {pipeline_mode = #tpu.pipeline_mode<synchronous>, transform_indices = @transform_2, window_bounds = array<i64: 1, 128>}, {pipeline_mode = #tpu.pipeline_mode<synchronous>, transform_indices = @transform_3, window_bounds = array<i64: 128, 128>}, {pipeline_mode = #tpu.pipeline_mode<synchronous>, transform_indices = @transform_4, window_bounds = array<i64: 1, 128>}, {pipeline_mode = #tpu.pipeline_mode<synchronous>, transform_indices = @transform_5, window_bounds = array<i64: 1, 128>}, {pipeline_mode = #tpu.pipeline_mode<synchronous>, transform_indices = @transform_6, window_bounds = array<i64: 1, 128>}, {transform_indices = @transform_7, window_bounds = array<i64: 8, 128>}]} {
    %c0 = arith.constant 0 : index
    %c0_0 = arith.constant 0 : index
    %0 = vector.load %arg2[%c0, %c0_0] : memref<8x128xf32, #tpu.memory_space<vmem>>, vector<8x128xf32>
    %1 = arith.truncf %0 : vector<8x128xf32> to vector<8x128xbf16>
    %c0_1 = arith.constant 0 : index
    %c0_2 = arith.constant 0 : index
    %2 = vector.load %arg3[%c0_1, %c0_2] : memref<128x128xbf16, #tpu.memory_space<vmem>>, vector<128x128xbf16>
    %cst = arith.constant dense<0.000000e+00> : vector<8x128xf32>
    %3 = tpu.matmul %1, %2, %cst {dimension_numbers = #tpu.dot_dimension_numbers<[1], [0], [0], [1], [0, 0, 1, 1], [], []>} : vector<8x128xbf16>, vector<128x128xbf16>, vector<8x128xf32> -> vector<8x128xf32>
    %c0_3 = arith.constant 0 : index
    %c0_4 = arith.constant 0 : index
    %4 = vector.load %arg4[%c0_3, %c0_4] : memref<1x128xf32, #tpu.memory_space<vmem>>, vector<1x128xf32>
    %5 = vector.broadcast %4 : vector<1x128xf32> to vector<8x128xf32>
    %6 = arith.addf %3, %5 : vector<8x128xf32>
    %cst_5 = arith.constant 0.000000e+00 : f32
    %7 = vector.broadcast %cst_5 : f32 to vector<8x128xf32>
    %8 = arith.maximumf %6, %7 : vector<8x128xf32>
    %9 = arith.truncf %8 : vector<8x128xf32> to vector<8x128xbf16>
    %c0_6 = arith.constant 0 : index
    %c0_7 = arith.constant 0 : index
    %10 = vector.load %arg5[%c0_6, %c0_7] : memref<128x128xbf16, #tpu.memory_space<vmem>>, vector<128x128xbf16>
    %cst_8 = arith.constant dense<0.000000e+00> : vector<8x128xf32>
    %11 = tpu.matmul %9, %10, %cst_8 {dimension_numbers = #tpu.dot_dimension_numbers<[1], [0], [0], [1], [0, 0, 1, 1], [], []>} : vector<8x128xbf16>, vector<128x128xbf16>, vector<8x128xf32> -> vector<8x128xf32>
    %c0_9 = arith.constant 0 : index
    %c0_10 = arith.constant 0 : index
    %12 = vector.load %arg6[%c0_9, %c0_10] : memref<1x128xf32, #tpu.memory_space<vmem>>, vector<1x128xf32>
    %13 = vector.broadcast %12 : vector<1x128xf32> to vector<8x128xf32>
    %14 = arith.addf %11, %13 : vector<8x128xf32>
    %15 = arith.addf %14, %0 : vector<8x128xf32>
    %cst_11 = arith.constant dense<0.000000e+00> : vector<8xf32>
    %16 = vector.multi_reduction <add>, %15, %cst_11 [1] : vector<8x128xf32> to vector<8xf32>
    %17 = vector.shape_cast %16 : vector<8xf32> to vector<8x1xf32>
    %cst_12 = arith.constant 3.125000e-02 : f32
    %18 = vector.broadcast %cst_12 : f32 to vector<8x1xf32>
    %19 = arith.mulf %17, %18 : vector<8x1xf32>
    %20 = tpu.iota {dimensions = array<i32: 1>} : vector<1x128xi32>
    %c32_i32 = arith.constant 32 : i32
    %21 = vector.broadcast %c32_i32 : i32 to vector<1x128xi32>
    %22 = arith.cmpi slt, %20, %21 : vector<1x128xi32>
    %23 = vector.broadcast %19 : vector<8x1xf32> to vector<8x128xf32>
    %24 = arith.subf %15, %23 : vector<8x128xf32>
    %cst_13 = arith.constant 0.000000e+00 : f32
    %25 = vector.shape_cast %22 : vector<1x128xi1> to vector<1x128xi1>
    %26 = vector.broadcast %25 : vector<1x128xi1> to vector<8x128xi1>
    %27 = vector.broadcast %cst_13 : f32 to vector<8x128xf32>
    %28 = arith.select %26, %24, %27 : vector<8x128xi1>, vector<8x128xf32>
    %29 = arith.mulf %28, %28 : vector<8x128xf32>
    %cst_14 = arith.constant dense<0.000000e+00> : vector<8xf32>
    %30 = vector.multi_reduction <add>, %29, %cst_14 [1] : vector<8x128xf32> to vector<8xf32>
    %31 = vector.shape_cast %30 : vector<8xf32> to vector<8x1xf32>
    %cst_15 = arith.constant 3.125000e-02 : f32
    %32 = vector.broadcast %cst_15 : f32 to vector<8x1xf32>
    %33 = arith.mulf %31, %32 : vector<8x1xf32>
    %cst_16 = arith.constant 9.99999974E-6 : f32
    %34 = vector.broadcast %cst_16 : f32 to vector<8x1xf32>
    %35 = arith.addf %33, %34 : vector<8x1xf32>
    %36 = math.rsqrt %35 : vector<8x1xf32>
    %37 = vector.broadcast %36 : vector<8x1xf32> to vector<8x128xf32>
    %38 = arith.mulf %28, %37 : vector<8x128xf32>
    %c0_17 = arith.constant 0 : index
    %c0_18 = arith.constant 0 : index
    %39 = vector.load %arg7[%c0_17, %c0_18] : memref<1x128xf32, #tpu.memory_space<vmem>>, vector<1x128xf32>
    %40 = vector.broadcast %39 : vector<1x128xf32> to vector<8x128xf32>
    %41 = arith.mulf %38, %40 : vector<8x128xf32>
    %c0_19 = arith.constant 0 : index
    %c0_20 = arith.constant 0 : index
    %42 = vector.load %arg8[%c0_19, %c0_20] : memref<1x128xf32, #tpu.memory_space<vmem>>, vector<1x128xf32>
    %43 = vector.broadcast %42 : vector<1x128xf32> to vector<8x128xf32>
    %44 = arith.addf %41, %43 : vector<8x128xf32>
    %c0_21 = arith.constant 0 : index
    %c0_22 = arith.constant 0 : index
    %45 = vector.load %arg9[%c0_21, %c0_22] : memref<8x128xf32, #tpu.memory_space<vmem>>, vector<8x128xf32>
    tpu.vector_store %arg9[%c0_21, %c0_22], %44 {strides = array<i32>} : memref<8x128xf32, #tpu.memory_space<vmem>>, vector<8x128xf32>,
    return
  }
  func.func @transform_0(%arg0: i32, %arg1: i32) -> (i32, i32) {
    %c0_i32 = arith.constant 0 : i32
    %c0_i32_0 = arith.constant 0 : i32
    return %arg0, %c0_i32 : i32, i32
  }
  func.func @transform_1(%arg0: i32, %arg1: i32) -> (i32, i32) {
    %c0_i32 = arith.constant 0 : i32
    %c0_i32_0 = arith.constant 0 : i32
    return %c0_i32, %arg1 : i32, i32
  }
  func.func @transform_2(%arg0: i32, %arg1: i32) -> (i32, i32) {
    %c0_i32 = arith.constant 0 : i32
    %c0_i32_0 = arith.constant 0 : i32
    return %c0_i32, %arg1 : i32, i32
  }
  func.func @transform_3(%arg0: i32, %arg1: i32) -> (i32, i32) {
    %c0_i32 = arith.constant 0 : i32
    %c0_i32_0 = arith.constant 0 : i32
    return %arg1, %c0_i32 : i32, i32
  }
  func.func @transform_4(%arg0: i32, %arg1: i32) -> (i32, i32) {
    %c0_i32 = arith.constant 0 : i32
    %c0_i32_0 = arith.constant 0 : i32
    %c0_i32_1 = arith.constant 0 : i32
    return %c0_i32, %c0_i32_0 : i32, i32
  }
  func.func @transform_5(%arg0: i32, %arg1: i32) -> (i32, i32) {
    %c0_i32 = arith.constant 0 : i32
    %c0_i32_0 = arith.constant 0 : i32
    %c0_i32_1 = arith.constant 0 : i32
    return %c0_i32, %c0_i32_0 : i32, i32
  }
  func.func @transform_6(%arg0: i32, %arg1: i32) -> (i32, i32) {
    %c0_i32 = arith.constant 0 : i32
    %c0_i32_0 = arith.constant 0 : i32
    %c0_i32_1 = arith.constant 0 : i32
    return %c0_i32, %c0_i32_0 : i32, i32
  }
  func.func @transform_7(%arg0: i32, %arg1: i32) -> (i32, i32) {
    %c0_i32 = arith.constant 0 : i32
    %c0_i32_0 = arith.constant 0 : i32
    return %arg0, %c0_i32 : i32, i32
  }
}

module attributes {stable_mosaic.version = 11 : i64} {
  func.func @_bottleneck_kernel(%arg0: i32, %arg1: i32, %arg2: memref<8x128xf32, #tpu.memory_space<vmem>>, %arg3: memref<128x128xbf16, #tpu.memory_space<vmem>>, %arg4: memref<1x128xf32, #tpu.memory_space<vmem>>, %arg5: memref<128x128xbf16, #tpu.memory_space<vmem>>, %arg6: memref<1x128xf32, #tpu.memory_space<vmem>>, %arg7: memref<1x128xf32, #tpu.memory_space<vmem>>, %arg8: memref<1x128xf32, #tpu.memory_space<vmem>>, %arg9: memref<8x128xf32, #tpu.memory_space<vmem>>) attributes {dimension_semantics = [#tpu.dimension_semantics<parallel>, #tpu.dimension_semantics<arbitrary>], iteration_bounds = array<i64: 2, 1>, scalar_prefetch = 0 : i64, scratch_operands = 0 : i64, tpu.core_type = #tpu.core_type<tc>, window_params = [{transform_indices = @transform_0, window_bounds = array<i64: 8, 128>}, {transform_indices = @transform_1, window_bounds = array<i64: 128, 128>}, {transform_indices = @transform_2, window_bounds = array<i64: 1, 128>}, {transform_indices = @transform_3, window_bounds = array<i64: 128, 128>}, {pipeline_mode = #tpu.pipeline_mode<synchronous>, transform_indices = @transform_4, window_bounds = array<i64: 1, 128>}, {pipeline_mode = #tpu.pipeline_mode<synchronous>, transform_indices = @transform_5, window_bounds = array<i64: 1, 128>}, {pipeline_mode = #tpu.pipeline_mode<synchronous>, transform_indices = @transform_6, window_bounds = array<i64: 1, 128>}, {transform_indices = @transform_7, window_bounds = array<i64: 8, 128>}]} {
    %c0 = arith.constant 0 : index
    %c0_0 = arith.constant 0 : index
    %0 = vector.load %arg2[%c0, %c0_0] : memref<8x128xf32, #tpu.memory_space<vmem>>, vector<8x128xf32>
    %1 = arith.truncf %0 : vector<8x128xf32> to vector<8x128xbf16>
    %c0_1 = arith.constant 0 : index
    %c0_2 = arith.constant 0 : index
    %2 = vector.load %arg3[%c0_1, %c0_2] : memref<128x128xbf16, #tpu.memory_space<vmem>>, vector<128x128xbf16>
    %cst = arith.constant dense<0.000000e+00> : vector<8x128xf32>
    %3 = tpu.matmul %1, %2, %cst {dimension_numbers = #tpu.dot_dimension_numbers<[1], [0], [0], [1], [0, 0, 1, 1], [], []>} : vector<8x128xbf16>, vector<128x128xbf16>, vector<8x128xf32> -> vector<8x128xf32>
    %c0_3 = arith.constant 0 : index
    %c0_4 = arith.constant 0 : index
    %4 = vector.load %arg4[%c0_3, %c0_4] : memref<1x128xf32, #tpu.memory_space<vmem>>, vector<1x128xf32>
    %5 = vector.broadcast %4 : vector<1x128xf32> to vector<8x128xf32>
    %6 = arith.addf %3, %5 : vector<8x128xf32>
    %cst_5 = arith.constant 0.000000e+00 : f32
    %7 = vector.broadcast %cst_5 : f32 to vector<8x128xf32>
    %8 = arith.maximumf %6, %7 : vector<8x128xf32>
    %9 = arith.truncf %8 : vector<8x128xf32> to vector<8x128xbf16>
    %c0_6 = arith.constant 0 : index
    %c0_7 = arith.constant 0 : index
    %10 = vector.load %arg5[%c0_6, %c0_7] : memref<128x128xbf16, #tpu.memory_space<vmem>>, vector<128x128xbf16>
    %cst_8 = arith.constant dense<0.000000e+00> : vector<8x128xf32>
    %11 = tpu.matmul %9, %10, %cst_8 {dimension_numbers = #tpu.dot_dimension_numbers<[1], [0], [0], [1], [0, 0, 1, 1], [], []>} : vector<8x128xbf16>, vector<128x128xbf16>, vector<8x128xf32> -> vector<8x128xf32>
    %c0_9 = arith.constant 0 : index
    %c0_10 = arith.constant 0 : index
    %12 = vector.load %arg6[%c0_9, %c0_10] : memref<1x128xf32, #tpu.memory_space<vmem>>, vector<1x128xf32>
    %13 = vector.broadcast %12 : vector<1x128xf32> to vector<8x128xf32>
    %14 = arith.addf %11, %13 : vector<8x128xf32>
    %15 = arith.addf %14, %0 : vector<8x128xf32>
    %cst_11 = arith.constant dense<0.000000e+00> : vector<8xf32>
    %16 = vector.multi_reduction <add>, %15, %cst_11 [1] : vector<8x128xf32> to vector<8xf32>
    %17 = vector.shape_cast %16 : vector<8xf32> to vector<8x1xf32>
    %cst_12 = arith.constant 3.125000e-02 : f32
    %18 = vector.broadcast %cst_12 : f32 to vector<8x1xf32>
    %19 = arith.mulf %17, %18 : vector<8x1xf32>
    %20 = tpu.iota {dimensions = array<i32: 1>} : vector<1x128xi32>
    %c32_i32 = arith.constant 32 : i32
    %21 = vector.broadcast %c32_i32 : i32 to vector<1x128xi32>
    %22 = arith.cmpi slt, %20, %21 : vector<1x128xi32>
    %23 = vector.broadcast %19 : vector<8x1xf32> to vector<8x128xf32>
    %24 = arith.subf %15, %23 : vector<8x128xf32>
    %cst_13 = arith.constant 0.000000e+00 : f32
    %25 = vector.shape_cast %22 : vector<1x128xi1> to vector<1x128xi1>
    %26 = vector.broadcast %25 : vector<1x128xi1> to vector<8x128xi1>
    %27 = vector.broadcast %cst_13 : f32 to vector<8x128xf32>
    %28 = arith.select %26, %24, %27 : vector<8x128xi1>, vector<8x128xf32>
    %29 = arith.mulf %28, %28 : vector<8x128xf32>
    %cst_14 = arith.constant dense<0.000000e+00> : vector<8xf32>
    %30 = vector.multi_reduction <add>, %29, %cst_14 [1] : vector<8x128xf32> to vector<8xf32>
    %31 = vector.shape_cast %30 : vector<8xf32> to vector<8x1xf32>
    %cst_15 = arith.constant 3.125000e-02 : f32
    %32 = vector.broadcast %cst_15 : f32 to vector<8x1xf32>
    %33 = arith.mulf %31, %32 : vector<8x1xf32>
    %cst_16 = arith.constant 9.99999974E-6 : f32
    %34 = vector.broadcast %cst_16 : f32 to vector<8x1xf32>
    %35 = arith.addf %33, %34 : vector<8x1xf32>
    %36 = math.rsqrt %35 : vector<8x1xf32>
    %37 = vector.broadcast %36 : vector<8x1xf32> to vector<8x128xf32>
    %38 = arith.mulf %28, %37 : vector<8x128xf32>
    %c0_17 = arith.constant 0 : index
    %c0_18 = arith.constant 0 : index
    %39 = vector.load %arg7[%c0_17, %c0_18] : memref<1x128xf32, #tpu.memory_space<vmem>>, vector<1x128xf32>
    %40 = vector.broadcast %39 : vector<1x128xf32> to vector<8x128xf32>
    %41 = arith.mulf %38, %40 : vector<8x128xf32>
    %c0_19 = arith.constant 0 : index
    %c0_20 = arith.constant 0 : index
    %42 = vector.load %arg8[%c0_19, %c0_20] : memref<1x128xf32, #tpu.memory_space<vmem>>, vector<1x128xf32>
    %43 = vector.broadcast %42 : vector<1x128xf32> to vector<8x128xf32>
    %44 = arith.addf %41, %43 : vector<8x128xf32>
    %c0_21 = arith.constant 0 : index
    %c0_22 = arith.constant 0 : index
    %45 = vector.load %arg9[%c0_21, %c0_22] : memref<8x128xf32, #tpu.memory_space<vmem>>, vector<8x128xf32>
    tpu.vector_store %arg9[%c0_21, %c0_22], %44 {strides = array<i32>} : memref<8x128xf32, #tpu.memory_space<vmem>>, vector<8x128xf32>,
    return
  }
  func.func @transform_0(%arg0: i32, %arg1: i32) -> (i32, i32) {
    %c0_i32 = arith.constant 0 : i32
    %c0_i32_0 = arith.constant 0 : i32
    return %arg0, %c0_i32 : i32, i32
  }
  func.func @transform_1(%arg0: i32, %arg1: i32) -> (i32, i32) {
    %c0_i32 = arith.constant 0 : i32
    %c0_i32_0 = arith.constant 0 : i32
    return %c0_i32, %arg1 : i32, i32
  }
  func.func @transform_2(%arg0: i32, %arg1: i32) -> (i32, i32) {
    %c0_i32 = arith.constant 0 : i32
    %c0_i32_0 = arith.constant 0 : i32
    return %c0_i32, %arg1 : i32, i32
  }
  func.func @transform_3(%arg0: i32, %arg1: i32) -> (i32, i32) {
    %c0_i32 = arith.constant 0 : i32
    %c0_i32_0 = arith.constant 0 : i32
    return %arg1, %c0_i32 : i32, i32
  }
  func.func @transform_4(%arg0: i32, %arg1: i32) -> (i32, i32) {
    %c0_i32 = arith.constant 0 : i32
    %c0_i32_0 = arith.constant 0 : i32
    %c0_i32_1 = arith.constant 0 : i32
    return %c0_i32, %c0_i32_0 : i32, i32
  }
  func.func @transform_5(%arg0: i32, %arg1: i32) -> (i32, i32) {
    %c0_i32 = arith.constant 0 : i32
    %c0_i32_0 = arith.constant 0 : i32
    %c0_i32_1 = arith.constant 0 : i32
    return %c0_i32, %c0_i32_0 : i32, i32
  }
  func.func @transform_6(%arg0: i32, %arg1: i32) -> (i32, i32) {
    %c0_i32 = arith.constant 0 : i32
    %c0_i32_0 = arith.constant 0 : i32
    %c0_i32_1 = arith.constant 0 : i32
    return %c0_i32, %c0_i32_0 : i32, i32
  }
  func.func @transform_7(%arg0: i32, %arg1: i32) -> (i32, i32) {
    %c0_i32 = arith.constant 0 : i32
    %c0_i32_0 = arith.constant 0 : i32
    return %arg0, %c0_i32 : i32, i32
  }
}

</mosaic_0001>

<llo_original>
// kernel: tpu_custom_call.1
$region0: #{tpu_custom_call.1}
  #allocation0 [shape = 'u32[]', space=smem, size = 0x4, offset = 0x4, fixed_abs, tag = 'smem constant byte address 0x4 - core index']
  #allocation1 [shape = 'u32[144,128]{1,0:T(1,128)}', space=vmem, size = 0x12000, scoped, tag = 'internal scratch']
  %s0 = inlined_call_operand.hbm [shape: f32[16,128], index: 0, kind: input, shape index: {}]
  %s1 = inlined_call_operand.hbm [shape: bf16[128,128], index: 1, kind: input, shape index: {}]
  %s2 = inlined_call_operand.vmem [shape: f32[1,128], index: 2, kind: input, shape index: {}]
  %s3 = inlined_call_operand.hbm [shape: bf16[128,128], index: 3, kind: input, shape index: {}]
  %s4 = inlined_call_operand.vmem [shape: f32[1,128], index: 4, kind: input, shape index: {}]
  %s5 = inlined_call_operand.vmem [shape: f32[1,128], index: 5, kind: input, shape index: {}]
  %s6 = inlined_call_operand.vmem [shape: f32[1,128], index: 6, kind: input, shape index: {}]
  %s7 = inlined_call_operand.hbm [shape: f32[16,128], index: 7, kind: output, shape index: {}]
  %s8 = sld [smem:[#allocation0]]
  $region73: #{tpu_custom_call.1} parent=0
    _
  %s10 = ssub.s32 1, %s8
  %s11 = scalar_select 0, %s10, %s8
  $region1: #{tpu_custom_call.1} parent=0
    #allocation2 [shape = 'u8[8192]{0}', space=vmem, size = 0x2000, scoped, tag = 'input window, operand 0']
    #allocation3 [shape = 's32[2]{0}', space=sflag, size = 0x8, scoped, tag = 'scoped memory for tpu_custom_call.1']
    #allocation4 [shape = 's32[2]{0}', space=sflag, size = 0x8, scoped, tag = 'scoped memory for tpu_custom_call.1']
    #allocation5 [shape = 'u8[32768]{0}', space=vmem, size = 0x8000, scoped, tag = 'input window, operand 1, single buffered']
    #allocation6 [shape = 's32[1]{0}', space=sflag, size = 0x4, scoped, tag = 'scoped memory for tpu_custom_call.1']
    #allocation7 [shape = 'u8[32768]{0}', space=vmem, size = 0x8000, scoped, tag = 'input window, operand 3, single buffered']
    #allocation8 [shape = 'u8[8192]{0}', space=vmem, size = 0x2000, scoped, tag = 'output window, operand 0']
    %12 = vsyncpa [#allocation3], 0
    %s13 = scalar_lea.sflag [#allocation3], 1
    %14 = vsyncpa %s13, 0
    %15 = vsyncpa [#allocation6], 0
    %16 = vsyncpa [#allocation4], 0
    %s17 = scalar_lea.sflag [#allocation4], 1
    %18 = vsyncpa %s17, 0
    loop: start=0, step=1, limit=4
    $region2: #{tpu_custom_call.1} parent=1 // loop_pre_header
      _
    $region3: #{tpu_custom_call.1} parent=1 // loop_header
      %s20 = sphi 0, %s24
      %p21 = scmp.ge.s32.totalorder %s20, 4
      %s27 = sphi 0, %s39
      %s28 = sphi 0, %s35
      %s29 = sphi 0, %s27
      %s30 = sphi 0, %s28
      %s31 = sphi 0, %s29
      %s32 = sphi 0, %s30
      %s42 = sphi 0, %s44
      %s45 = sphi 0, %s42
      %s46 = sphi 0, %s45
      %s62 = sphi 0, %s46
      %s68 = sphi 0, %s70
      %s71 = sphi 0, %s68
      %s72 = sphi 0, %s71
      %s88 = sphi 0, %s72
      %s94 = sphi 0, %s96
      %s97 = sphi 0, %s94
      %s98 = sphi 0, %s97
      %s114 = sphi 0, %s98
      %s120 = sphi 0, %s122
      %s123 = sphi 0, %s120
      %s124 = sphi 0, %s123
      %s140 = sphi 0, %s124
      %s144 = sphi 0, %s144
      %s146 = sphi 0, %s144
      %s147 = sphi 0, %s146
      %s161 = sphi 0, %s147
      %s165 = sphi 0, %s165
      %s167 = sphi 0, %s165
      %s168 = sphi 0, %s167
      %s182 = sphi 0, %s168
      %s186 = sphi 0, %s186
      %s188 = sphi 0, %s186
      %s189 = sphi 0, %s188
      %s203 = sphi 0, %s189
      %s209 = sphi 0, %s211
      %s212 = sphi 0, %s209
      %s213 = sphi 0, %s212
      %s229 = sphi 0, %s213
    $region4: #{tpu_custom_call.1} parent=1 // loop_header_branch
      %23 = sbr.rel (%p21) target = $region8
    $region5: #{tpu_custom_call.1} parent=1 // loop_body
      %s25 = ssub.s32 %s20, 1
      %s26 = ssub.s32 %s20, 2
      %s33 = sadd.s32 1, %s28
      %p34 = scmp.ge.s32.totalorder %s33, 1
      %s35 = scalar_select %p34, 0, %s33
      %s36 = sadd.s32 1, %s27
      %s37 = scalar_select %p34, %s36, %s27
      %p38 = scmp.ge.s32.totalorder %s37, 2
      %s39 = scalar_select %p38, 0, %s37
      %s40 = ssub.s32 %s27, %s39
      %p41 = scmp.eq.s32.totalorder %s40, 0
      %s43 = sadd.s32 %s42, 1
      %s44 = scalar_select %p41, %s42, %s43
      %p47 = pneg %p41
      %p48 = scmp.eq.s32.totalorder %s20, 1
      %p49 = por %p47, %p48
      %p50 = scmp.ne.s32.totalorder %s42, %s45
      %p51 = scmp.eq.s32.totalorder %s20, 0
      %p52 = por %p50, %p51
      %p53 = scmp.ne.s32.totalorder %s42, %s45
      %p54 = scmp.eq.s32.totalorder %s25, 1
      %p55 = por %p53, %p54
      %p56 = scmp.ne.s32.totalorder %s45, %s46
      %p57 = scmp.eq.s32.totalorder %s25, 0
      %p58 = por %p56, %p57
      %p59 = scmp.ne.s32.totalorder %s45, %s46
      %p60 = scmp.eq.s32.totalorder %s26, 1
      %p61 = por %p59, %p60
      %p63 = scmp.ne.s32.totalorder %s46, %s62
      %p64 = scmp.eq.s32.totalorder %s26, 0
      %p65 = por %p63, %p64
      %s66 = ssub.s32 %s28, %s35
      %p67 = scmp.eq.s32.totalorder %s66, 0
      %s69 = sadd.s32 %s68, 1
      %s70 = scalar_select %p67, %s68, %s69
      %p73 = pneg %p67
      %p74 = scmp.eq.s32.totalorder %s20, 1
      %p75 = por %p73, %p74
      %p76 = scmp.ne.s32.totalorder %s68, %s71
      %p77 = scmp.eq.s32.totalorder %s20, 0
      %p78 = por %p76, %p77
      %p79 = scmp.ne.s32.totalorder %s68, %s71
      %p80 = scmp.eq.s32.totalorder %s25, 1
      %p81 = por %p79, %p80
      %p82 = scmp.ne.s32.totalorder %s71, %s72
      %p83 = scmp.eq.s32.totalorder %s25, 0
      %p84 = por %p82, %p83
      %p85 = scmp.ne.s32.totalorder %s71, %s72
      %p86 = scmp.eq.s32.totalorder %s26, 1
      %p87 = por %p85, %p86
      %p89 = scmp.ne.s32.totalorder %s72, %s88
      %p90 = scmp.eq.s32.totalorder %s26, 0
      %p91 = por %p89, %p90
      %s92 = ssub.s32 %s28, %s35
      %p93 = scmp.eq.s32.totalorder %s92, 0
      %s95 = sadd.s32 %s94, 1
      %s96 = scalar_select %p93, %s94, %s95
      %p99 = pneg %p93
      %p100 = scmp.eq.s32.totalorder %s20, 1
      %p101 = por %p99, %p100
      %p102 = scmp.ne.s32.totalorder %s94, %s97
      %p103 = scmp.eq.s32.totalorder %s20, 0
      %p104 = por %p102, %p103
      %p105 = scmp.ne.s32.totalorder %s94, %s97
      %p106 = scmp.eq.s32.totalorder %s25, 1
      %p107 = por %p105, %p106
      %p108 = scmp.ne.s32.totalorder %s97, %s98
      %p109 = scmp.eq.s32.totalorder %s25, 0
      %p110 = por %p108, %p109
      %p111 = scmp.ne.s32.totalorder %s97, %s98
      %p112 = scmp.eq.s32.totalorder %s26, 1
      %p113 = por %p111, %p112
      %p115 = scmp.ne.s32.totalorder %s98, %s114
      %p116 = scmp.eq.s32.totalorder %s26, 0
      %p117 = por %p115, %p116
      %s118 = ssub.s32 %s28, %s35
      %p119 = scmp.eq.s32.totalorder %s118, 0
      %s121 = sadd.s32 %s120, 1
      %s122 = scalar_select %p119, %s120, %s121
      %p125 = pneg %p119
      %p126 = scmp.eq.s32.totalorder %s20, 1
      %p127 = por %p125, %p126
      %p128 = scmp.ne.s32.totalorder %s120, %s123
      %p129 = scmp.eq.s32.totalorder %s20, 0
      %p130 = por %p128, %p129
      %p131 = scmp.ne.s32.totalorder %s120, %s123
      %p132 = scmp.eq.s32.totalorder %s25, 1
      %p133 = por %p131, %p132
      %p134 = scmp.ne.s32.totalorder %s123, %s124
      %p135 = scmp.eq.s32.totalorder %s25, 0
      %p136 = por %p134, %p135
      %p137 = scmp.ne.s32.totalorder %s123, %s124
      %p138 = scmp.eq.s32.totalorder %s26, 1
      %p139 = por %p137, %p138
      %p141 = scmp.ne.s32.totalorder %s124, %s140
      %p142 = scmp.eq.s32.totalorder %s26, 0
      %p143 = por %p141, %p142
      %s145 = sadd.s32 %s144, 1
      %p148 = scmp.eq.s32.totalorder %s20, 1
      %p149 = scmp.ne.s32.totalorder %s144, %s146
      %p150 = scmp.eq.s32.totalorder %s20, 0
      %p151 = por %p149, %p150
      %p152 = scmp.ne.s32.totalorder %s144, %s146
      %p153 = scmp.eq.s32.totalorder %s25, 1
      %p154 = por %p152, %p153
      %p155 = scmp.ne.s32.totalorder %s146, %s147
      %p156 = scmp.eq.s32.totalorder %s25, 0
      %p157 = por %p155, %p156
      %p158 = scmp.ne.s32.totalorder %s146, %s147
      %p159 = scmp.eq.s32.totalorder %s26, 1
      %p160 = por %p158, %p159
      %p162 = scmp.ne.s32.totalorder %s147, %s161
      %p163 = scmp.eq.s32.totalorder %s26, 0
      %p164 = por %p162, %p163
      %s166 = sadd.s32 %s165, 1
      %p169 = scmp.eq.s32.totalorder %s20, 1
      %p170 = scmp.ne.s32.totalorder %s165, %s167
      %p171 = scmp.eq.s32.totalorder %s20, 0
      %p172 = por %p170, %p171
      %p173 = scmp.ne.s32.totalorder %s165, %s167
      %p174 = scmp.eq.s32.totalorder %s25, 1
      %p175 = por %p173, %p174
      %p176 = scmp.ne.s32.totalorder %s167, %s168
      %p177 = scmp.eq.s32.totalorder %s25, 0
      %p178 = por %p176, %p177
      %p179 = scmp.ne.s32.totalorder %s167, %s168
      %p180 = scmp.eq.s32.totalorder %s26, 1
      %p181 = por %p179, %p180
      %p183 = scmp.ne.s32.totalorder %s168, %s182
      %p184 = scmp.eq.s32.totalorder %s26, 0
      %p185 = por %p183, %p184
      %s187 = sadd.s32 %s186, 1
      %p190 = scmp.eq.s32.totalorder %s20, 1
      %p191 = scmp.ne.s32.totalorder %s186, %s188
      %p192 = scmp.eq.s32.totalorder %s20, 0
      %p193 = por %p191, %p192
      %p194 = scmp.ne.s32.totalorder %s186, %s188
      %p195 = scmp.eq.s32.totalorder %s25, 1
      %p196 = por %p194, %p195
      %p197 = scmp.ne.s32.totalorder %s188, %s189
      %p198 = scmp.eq.s32.totalorder %s25, 0
      %p199 = por %p197, %p198
      %p200 = scmp.ne.s32.totalorder %s188, %s189
      %p201 = scmp.eq.s32.totalorder %s26, 1
      %p202 = por %p200, %p201
      %p204 = scmp.ne.s32.totalorder %s189, %s203
      %p205 = scmp.eq.s32.totalorder %s26, 0
      %p206 = por %p204, %p205
      %s207 = ssub.s32 %s27, %s39
      %p208 = scmp.eq.s32.totalorder %s207, 0
      %s210 = sadd.s32 %s209, 1
      %s211 = scalar_select %p208, %s209, %s210
      %p214 = pneg %p208
      %p215 = scmp.eq.s32.totalorder %s20, 1
      %p216 = por %p214, %p215
      %p217 = scmp.ne.s32.totalorder %s209, %s212
      %p218 = scmp.eq.s32.totalorder %s20, 0
      %p219 = por %p217, %p218
      %p220 = scmp.ne.s32.totalorder %s209, %s212
      %p221 = scmp.eq.s32.totalorder %s25, 1
      %p222 = por %p220, %p221
      %p223 = scmp.ne.s32.totalorder %s212, %s213
      %p224 = scmp.eq.s32.totalorder %s25, 0
      %p225 = por %p223, %p224
      %p226 = scmp.ne.s32.totalorder %s212, %s213
      %p227 = scmp.eq.s32.totalorder %s26, 1
      %p228 = por %p226, %p227
      %p230 = scmp.ne.s32.totalorder %s213, %s229
      %p231 = scmp.eq.s32.totalorder %s26, 0
      %p232 = por %p230, %p231
      %p233 = scmp.le.s32.totalorder 1, %s20
      %p234 = scmp.lt.s32.totalorder %s20, 3
      %p235 = pnand %p233, %p234
      %p236 = pneg %p235
      // Predicated region
      $region9: #{tpu_custom_call.1} parent=5 // pred_check
        _
      $region10: #{tpu_custom_call.1} parent=5 // pred_check_branch
        %238 = sbr.rel (%p235) target = $region12
      $region11: #{tpu_custom_call.1} parent=5 // pred_region
        %s239 = ssub.s32 %s20, 1
        // Predicated region
        $region13: #{tpu_custom_call.1} parent=11 // pred_check
          %p240 = pneg %p84
        $region14: #{tpu_custom_call.1} parent=11 // pred_check_branch
          %242 = sbr.rel (%p240) target = $region16
        $region15: #{tpu_custom_call.1} parent=11 // pred_region
          %s244 = ssub.s32 1024, 1024
          %245 = vsyncadd [#allocation6], %s244
          %s246 = smul.addr %s30, 64
          %s247 = scalar_lea.hbm %s1, %s246
          %s248 = sshll.u32 [#allocation5], 4
          %s249 = int_to_ptr.vmem [resolvable:$true] %s248
          %254 = dma.hbm_to_vmem [thread:$0]  %s247, 1024, %s249, [#allocation6], 64, 64, 4
        $region16: #{tpu_custom_call.1} parent=11 // pred_fallthru
          _
        // Predicated region
        $region17: #{tpu_custom_call.1} parent=11 // pred_check
          %p255 = pneg %p110
        $region18: #{tpu_custom_call.1} parent=11 // pred_check_branch
          %257 = sbr.rel (%p255) target = $region20
        $region19: #{tpu_custom_call.1} parent=11 // pred_region
          %p258 = scmp.lt.s32.totalorder %s30, 0
          %s259 = scalar_select %p258, %s30, 0
          %s260 = scalar_lea.vmem %s2, %s259
        $region20: #{tpu_custom_call.1} parent=11 // pred_fallthru
          _
        // Predicated region
        $region21: #{tpu_custom_call.1} parent=11 // pred_check
          %p261 = pneg %p136
        $region22: #{tpu_custom_call.1} parent=11 // pred_check_branch
          %263 = sbr.rel (%p261) target = $region24
        $region23: #{tpu_custom_call.1} parent=11 // pred_region
          %s264 = smul.u32 16, %s30
          %s266 = ssub.s32 1024, 1024
          %267 = vsyncadd [#allocation6], %s266
          %s268 = smul.addr %s264, 64
          %s269 = scalar_lea.hbm %s3, %s268
          %s270 = sshll.u32 [#allocation7], 4
          %s271 = int_to_ptr.vmem [resolvable:$true] %s270
          %276 = dma.hbm_to_vmem [thread:$0]  %s269, 1024, %s271, [#allocation6], 64, 64, 4
        $region24: #{tpu_custom_call.1} parent=11 // pred_fallthru
          _
        // Predicated region
        $region25: #{tpu_custom_call.1} parent=11 // pred_check
          %p277 = pneg %p157
        $region26: #{tpu_custom_call.1} parent=11 // pred_check_branch
          %279 = sbr.rel (%p277) target = $region28
        $region27: #{tpu_custom_call.1} parent=11 // pred_region
          _
        $region28: #{tpu_custom_call.1} parent=11 // pred_fallthru
          _
        // Predicated region
        $region29: #{tpu_custom_call.1} parent=11 // pred_check
          %p280 = pneg %p178
        $region30: #{tpu_custom_call.1} parent=11 // pred_check_branch
          %282 = sbr.rel (%p280) target = $region32
        $region31: #{tpu_custom_call.1} parent=11 // pred_region
          _
        $region32: #{tpu_custom_call.1} parent=11 // pred_fallthru
          _
        // Predicated region
        $region33: #{tpu_custom_call.1} parent=11 // pred_check
          %p283 = pneg %p199
        $region34: #{tpu_custom_call.1} parent=11 // pred_check_branch
          %285 = sbr.rel (%p283) target = $region36
        $region35: #{tpu_custom_call.1} parent=11 // pred_region
          _
        $region36: #{tpu_custom_call.1} parent=11 // pred_fallthru
          _
      $region12: #{tpu_custom_call.1} parent=5 // pred_fallthru
        _
      %p286 = scmp.lt.s32.totalorder %s20, 2
      // Predicated region
      $region37: #{tpu_custom_call.1} parent=5 // pred_check
        %p287 = pneg %p286
      $region38: #{tpu_custom_call.1} parent=5 // pred_check_branch
        %289 = sbr.rel (%p287) target = $region40
      $region39: #{tpu_custom_call.1} parent=5 // pred_region
        // Predicated region
        $region41: #{tpu_custom_call.1} parent=39 // pred_check
          %p290 = pneg %p52
        $region42: #{tpu_custom_call.1} parent=39 // pred_check_branch
          %292 = sbr.rel (%p290) target = $region44
        $region43: #{tpu_custom_call.1} parent=39 // pred_region
          %s293 = sand.u32 %s42, 1
          %s294 = scalar_lea.sflag [#allocation3], %s293
          %s295 = sand.u32 %s42, 1
          %s296 = smul.addr %s295, 8
          %s297 = scalar_lea.vmem [#allocation2], %s296
          %s299 = ssub.s32 128, 128
          %300 = vsyncadd %s294, %s299
          %s301 = smul.addr %s27, 128
          %s302 = scalar_lea.hbm %s0, %s301
          %s304 = sshll.u32 %s297, 4
          %s305 = int_to_ptr.vmem [resolvable:$true] %s304
          %307 = dma.hbm_to_vmem [thread:$0]  %s302, 128, %s305, %s294
        $region44: #{tpu_custom_call.1} parent=39 // pred_fallthru
          _
      $region40: #{tpu_custom_call.1} parent=5 // pred_fallthru
        _
      %p308 = scmp.le.s32.totalorder 1, %s20
      %p309 = scmp.lt.s32.totalorder %s20, 3
      %p310 = pnand %p308, %p309
      %p311 = pneg %p310
      // Predicated region
      $region45: #{tpu_custom_call.1} parent=5 // pred_check
        _
      $region46: #{tpu_custom_call.1} parent=5 // pred_check_branch
        %313 = sbr.rel (%p310) target = $region48
      $region47: #{tpu_custom_call.1} parent=5 // pred_region
        %s314 = ssub.s32 %s20, 1
        %s315 = sand.u32 %s45, 1
        %s316 = scalar_lea.sflag [#allocation3], %s315
        %s317 = sand.u32 %s45, 1
        %s318 = smul.addr %s317, 8
        %s319 = scalar_lea.vmem [#allocation2], %s318
        // Predicated region
        $region49: #{tpu_custom_call.1} parent=47 // pred_check
          %p320 = pneg %p58
        $region50: #{tpu_custom_call.1} parent=47 // pred_check_branch
          %322 = sbr.rel (%p320) target = $region52
        $region51: #{tpu_custom_call.1} parent=47 // pred_region
          %323 = dma.done %s316, 128
        $region52: #{tpu_custom_call.1} parent=47 // pred_fallthru
          _
        // Predicated region
        $region53: #{tpu_custom_call.1} parent=47 // pred_check
          %p324 = pneg %p84
        $region54: #{tpu_custom_call.1} parent=47 // pred_check_branch
          %326 = sbr.rel (%p324) target = $region56
        $region55: #{tpu_custom_call.1} parent=47 // pred_region
          %327 = dma.done [#allocation6], 1024
        $region56: #{tpu_custom_call.1} parent=47 // pred_fallthru
          _
        // Predicated region
        $region57: #{tpu_custom_call.1} parent=47 // pred_check
          %p328 = pneg %p136
        $region58: #{tpu_custom_call.1} parent=47 // pred_check_branch
          %330 = sbr.rel (%p328) target = $region60
        $region59: #{tpu_custom_call.1} parent=47 // pred_region
          %331 = dma.done [#allocation6], 1024
        $region60: #{tpu_custom_call.1} parent=47 // pred_fallthru
          _
        %s332 = sand.u32 %s45, 1
        %s333 = scalar_lea.sflag [#allocation3], %s332
        %s334 = sand.u32 %s45, 1
        %s335 = smul.addr %s334, 8
        %s336 = scalar_lea.vmem [#allocation2], %s335
        %p337 = pneg %p58
        %p338 = pneg %p55
        %p339 = pneg %p84
        %p340 = pneg %p81
        %p341 = scmp.lt.s32.totalorder %s30, 0
        %s342 = scalar_select %p341, %s30, 0
        %s343 = scalar_lea.vmem %s2, %s342
        %p344 = pneg %p110
        %p345 = pneg %p107
        %p346 = pneg %p136
        %p347 = pneg %p133
        %p348 = pneg %p157
        %p349 = pneg %p154
        %p350 = pneg %p178
        %p351 = pneg %p175
        %p352 = pneg %p199
        %p353 = pneg %p196
        %p354 = pneg %p225
        %p355 = pneg %p222
        %s356 = sand.u32 %s212, 1
        %s357 = scalar_lea.sflag [#allocation4], %s356
        %s358 = sand.u32 %s212, 1
        %s359 = smul.addr %s358, 8
        %s360 = scalar_lea.vmem [#allocation8], %s359
        %p361 = scmp.lt.s32.totalorder %s30, 0
        %s362 = scalar_select %p361, %s30, 0
        %s363 = scalar_lea.vmem %s2, %s362
        %s364 = smul.u32 16, %s30
        %v366 = vld [vmem:[%s319] sm:$0xff]
        %v367 = vpack.c.bf16 %v366, %v366
        %v368 = vld [vmem:[#allocation5] sm:$0xf]
        %v369 = vld [vmem:[#allocation5 + $0x4] sm:$0xf]
        %v370 = vld [vmem:[#allocation5 + $0x8] sm:$0xf]
        %v371 = vld [vmem:[#allocation5 + $0xc] sm:$0xf]
        %v372 = vld [vmem:[#allocation5 + $0x10] sm:$0xf]
        %v373 = vld [vmem:[#allocation5 + $0x14] sm:$0xf]
        %v374 = vld [vmem:[#allocation5 + $0x18] sm:$0xf]
        %v375 = vld [vmem:[#allocation5 + $0x1c] sm:$0xf]
        %v376 = vld [vmem:[#allocation5 + $0x20] sm:$0xf]
        %v377 = vld [vmem:[#allocation5 + $0x24] sm:$0xf]
        %v378 = vld [vmem:[#allocation5 + $0x28] sm:$0xf]
        %v379 = vld [vmem:[#allocation5 + $0x2c] sm:$0xf]
        %v380 = vld [vmem:[#allocation5 + $0x30] sm:$0xf]
        %v381 = vld [vmem:[#allocation5 + $0x34] sm:$0xf]
        %v382 = vld [vmem:[#allocation5 + $0x38] sm:$0xf]
        %v383 = vld [vmem:[#allocation5 + $0x3c] sm:$0xf]
        %v384 = vld [vmem:[%s363] sm:$0x1]
        %v386 = vlaneseq
        %v387 = vshrl.u32 %v386, 7
        %v388 = vsub.s32 0, %v387
        %v389 = vrot.slane %v384, %v388
        %v407 = vunpack.c.l.b16 %v368
        %v408 = vunpack.c.l.b16 %v369
        %v409 = vunpack.c.l.b16 %v370
        %v410 = vunpack.c.l.b16 %v371
        %v411 = vunpack.c.l.b16 %v372
        %v412 = vunpack.c.l.b16 %v373
        %v413 = vunpack.c.l.b16 %v374
        %v414 = vunpack.c.l.b16 %v375
        %v415 = vunpack.c.l.b16 %v376
        %v416 = vunpack.c.l.b16 %v377
        %v417 = vunpack.c.l.b16 %v378
        %v418 = vunpack.c.l.b16 %v379
        %v419 = vunpack.c.l.b16 %v380
        %v420 = vunpack.c.l.b16 %v381
        %v421 = vunpack.c.l.b16 %v382
        %v422 = vunpack.c.l.b16 %v383
        %v423 = vpack.c.b16 %v408, %v407
        %v424 = vpack.c.b16 %v410, %v409
        %v425 = vpack.c.b16 %v412, %v411
        %v426 = vpack.c.b16 %v414, %v413
        %v427 = vpack.c.b16 %v416, %v415
        %v428 = vpack.c.b16 %v418, %v417
        %v429 = vpack.c.b16 %v420, %v419
        %v430 = vpack.c.b16 %v422, %v421
        %439 = vmatprep.subr.bf16.mxu0 0
        %440 = vmatpush1.bf16.msra.mxu0 %v423
        %441 = vmatprep.subr.bf16.mxu0 0
        %442 = vmatpush1.bf16.msra.mxu0 %v424
        %443 = vmatprep.subr.bf16.mxu0 0
        %444 = vmatpush1.bf16.msra.mxu0 %v425
        %445 = vmatprep.subr.bf16.mxu0 0
        %446 = vmatpush1.bf16.msra.mxu0 %v426
        %447 = vmatprep.subr.bf16.mxu0 0
        %448 = vmatpush1.bf16.msra.mxu0 %v427
        %449 = vmatprep.subr.bf16.mxu0 0
        %450 = vmatpush1.bf16.msra.mxu0 %v428
        %451 = vmatprep.subr.bf16.mxu0 0
        %452 = vmatpush1.bf16.msra.mxu0 %v429
        %453 = vmatprep.subr.bf16.mxu0 0
        %454 = vmatpush1.bf16.msra.mxu0 %v430
        %455 = vmatprep.subr.bf16.mxu0 0
        %456 = vmatpush1.bf16.msra.mxu0 0
        %457 = vmatprep.subr.bf16.mxu0 0
        %458 = vmatpush1.bf16.msra.mxu0 0
        %459 = vmatprep.subr.bf16.mxu0 0
        %460 = vmatpush1.bf16.msra.mxu0 0
        %461 = vmatprep.subr.bf16.mxu0 0
        %462 = vmatpush1.bf16.msra.mxu0 0
        %463 = vmatprep.subr.bf16.mxu0 0
        %464 = vmatpush1.bf16.msra.mxu0 0
        %465 = vmatprep.subr.bf16.mxu0 0
        %466 = vmatpush1.bf16.msra.mxu0 0
        %467 = vmatprep.subr.bf16.mxu0 0
        %468 = vmatpush1.bf16.msra.mxu0 0
        %469 = vmatprep.subr.bf16.mxu0 0
        %470 = vmatpush1.bf16.msra.mxu0 0
        %471 = vmatprep.mubr.bf16.mxu0 0
        %472 = vmatmul.mubr.bf16.gmra.mrb[0].mxu0 %v367
        %v473 = vpop.f32.mrb[0].mxu0
        %v474 = vadd.f32 %v389, %v473
        %v475 = vpop.f32.mrb[0].mxu0
        %v476 = vpop.f32.mrb[0].mxu0
        %v477 = vpop.f32.mrb[0].mxu0
        %478 = vdwg.mxu0
        %v479 = vmax.f32 %v474, 0.0
        %v480 = vpack.c.bf16 %v479, %v479
        %v481 = vld [vmem:[#allocation7] sm:$0xf]
        %v482 = vld [vmem:[#allocation7 + $0x4] sm:$0xf]
        %v483 = vld [vmem:[#allocation7 + $0x8] sm:$0xf]
        %v484 = vld [vmem:[#allocation7 + $0xc] sm:$0xf]
        %v485 = vld [vmem:[#allocation7 + $0x10] sm:$0xf]
        %v486 = vld [vmem:[#allocation7 + $0x14] sm:$0xf]
        %v487 = vld [vmem:[#allocation7 + $0x18] sm:$0xf]
        %v488 = vld [vmem:[#allocation7 + $0x1c] sm:$0xf]
        %v489 = vld [vmem:[#allocation7 + $0x20] sm:$0xf]
        %v490 = vld [vmem:[#allocation7 + $0x24] sm:$0xf]
        %v491 = vld [vmem:[#allocation7 + $0x28] sm:$0xf]
        %v492 = vld [vmem:[#allocation7 + $0x2c] sm:$0xf]
        %v493 = vld [vmem:[#allocation7 + $0x30] sm:$0xf]
        %v494 = vld [vmem:[#allocation7 + $0x34] sm:$0xf]
        %v495 = vld [vmem:[#allocation7 + $0x38] sm:$0xf]
        %v496 = vld [vmem:[#allocation7 + $0x3c] sm:$0xf]
        %v497 = vld [vmem:[%s4] sm:$0x1]
        %v499 = vlaneseq
        %v500 = vshrl.u32 %v499, 7
        %v501 = vsub.s32 0, %v500
        %v502 = vrot.slane %v497, %v501
        %v520 = vunpack.c.l.b16 %v481
        %v521 = vunpack.c.l.b16 %v482
        %v522 = vunpack.c.l.b16 %v483
        %v523 = vunpack.c.l.b16 %v484
        %v524 = vunpack.c.l.b16 %v485
        %v525 = vunpack.c.l.b16 %v486
        %v526 = vunpack.c.l.b16 %v487
        %v527 = vunpack.c.l.b16 %v488
        %v528 = vunpack.c.l.b16 %v489
        %v529 = vunpack.c.l.b16 %v490
        %v530 = vunpack.c.l.b16 %v491
        %v531 = vunpack.c.l.b16 %v492
        %v532 = vunpack.c.l.b16 %v493
        %v533 = vunpack.c.l.b16 %v494
        %v534 = vunpack.c.l.b16 %v495
        %v535 = vunpack.c.l.b16 %v496
        %v536 = vpack.c.b16 %v521, %v520
        %v537 = vpack.c.b16 %v523, %v522
        %v538 = vpack.c.b16 %v525, %v524
        %v539 = vpack.c.b16 %v527, %v526
        %v540 = vpack.c.b16 %v529, %v528
        %v541 = vpack.c.b16 %v531, %v530
        %v542 = vpack.c.b16 %v533, %v532
        %v543 = vpack.c.b16 %v535, %v534
        %552 = vmatprep.subr.bf16.mxu0 0
        %553 = vmatpush1.bf16.msra.mxu0 %v536
        %554 = vmatprep.subr.bf16.mxu0 0
        %555 = vmatpush1.bf16.msra.mxu0 %v537
        %556 = vmatprep.subr.bf16.mxu0 0
        %557 = vmatpush1.bf16.msra.mxu0 %v538
        %558 = vmatprep.subr.bf16.mxu0 0
        %559 = vmatpush1.bf16.msra.mxu0 %v539
        %560 = vmatprep.subr.bf16.mxu0 0
        %561 = vmatpush1.bf16.msra.mxu0 %v540
        %562 = vmatprep.subr.bf16.mxu0 0
        %563 = vmatpush1.bf16.msra.mxu0 %v541
        %564 = vmatprep.subr.bf16.mxu0 0
        %565 = vmatpush1.bf16.msra.mxu0 %v542
        %566 = vmatprep.subr.bf16.mxu0 0
        %567 = vmatpush1.bf16.msra.mxu0 %v543
        %568 = vmatprep.subr.bf16.mxu0 0
        %569 = vmatpush1.bf16.msra.mxu0 0
        %570 = vmatprep.subr.bf16.mxu0 0
        %571 = vmatpush1.bf16.msra.mxu0 0
        %572 = vmatprep.subr.bf16.mxu0 0
        %573 = vmatpush1.bf16.msra.mxu0 0
        %574 = vmatprep.subr.bf16.mxu0 0
        %575 = vmatpush1.bf16.msra.mxu0 0
        %576 = vmatprep.subr.bf16.mxu0 0
        %577 = vmatpush1.bf16.msra.mxu0 0
        %578 = vmatprep.subr.bf16.mxu0 0
        %579 = vmatpush1.bf16.msra.mxu0 0
        %580 = vmatprep.subr.bf16.mxu0 0
        %581 = vmatpush1.bf16.msra.mxu0 0
        %582 = vmatprep.subr.bf16.mxu0 0
        %583 = vmatpush1.bf16.msra.mxu0 0
        %584 = vmatprep.mubr.bf16.mxu0 0
        %585 = vmatmul.mubr.bf16.gmra.mrb[0].mxu0 %v480
        %v586 = vpop.f32.mrb[0].mxu0
        %v587 = vadd.f32 %v502, %v586
        %v588 = vpop.f32.mrb[0].mxu0
        %v589 = vpop.f32.mrb[0].mxu0
        %v590 = vpop.f32.mrb[0].mxu0
        %591 = vdwg.mxu0
        %v592 = vadd.f32 %v587, %v366
        %593 = vadd.xlane.f32.xlu0 %v592
        %v594 = vpop.xlane.xlu0 %593
        %v595 = vmul.f32 %v594, 0.03125
        %v596 = vlaneseq
        %v597 = vand.u32 %v596, 127
        %vm598 = vcmp.lt.s32.totalorder %v597, 32
        %v599 = vsub.f32 %v592, %v595
        %v600 = vsel %vm598, 1, 0
        %vm601 = vcmp.eq.s32.totalorder %v600, 1
        %v602 = vsel %vm601, %v599, 0.0
        %v603 = vmul.f32 %v602, %v602
        %604 = vadd.xlane.f32.xlu0 %v603
        %v605 = vpop.xlane.xlu0 %604
        %v606 = vmul.f32 %v605, 0.03125
        %v607 = vadd.f32 %v606, 1e-05
        %v608 = vrsqrt.pop %v607
        %v609 = vmul.f32 %v602, %v608
        %v610 = vld [vmem:[%s5] sm:$0x1]
        %v612 = vlaneseq
        %v613 = vshrl.u32 %v612, 7
        %v614 = vsub.s32 0, %v613
        %v615 = vrot.slane %v610, %v614
        %v617 = vmul.f32 %v609, %v615
        %v618 = vld [vmem:[%s6] sm:$0x1]
        %v620 = vlaneseq
        %v621 = vshrl.u32 %v620, 7
        %v622 = vsub.s32 0, %v621
        %v623 = vrot.slane %v618, %v622
        %v625 = vadd.f32 %v617, %v623
        %626 = vst [vmem:[%s360] sm:$0xff] %v625
        %s627 = sand.u32 %s212, 1
        %s628 = scalar_lea.sflag [#allocation4], %s627
        %s629 = sand.u32 %s212, 1
        %s630 = smul.addr %s629, 8
        %s631 = scalar_lea.vmem [#allocation8], %s630
        // Predicated region
        $region61: #{tpu_custom_call.1} parent=47 // pred_check
          %p632 = pneg %p222
        $region62: #{tpu_custom_call.1} parent=47 // pred_check_branch
          %634 = sbr.rel (%p632) target = $region64
        $region63: #{tpu_custom_call.1} parent=47 // pred_region
          %s636 = ssub.s32 128, 128
          %637 = vsyncadd %s628, %s636
          %s638 = smul.addr %s29, 128
          %s639 = scalar_lea.hbm %s7, %s638
          %s641 = sshll.u32 %s631, 4
          %s642 = int_to_ptr.vmem [resolvable:$true] %s641
          %644 = dma.vmem_to_hbm [thread:$0]  %s642, 128, %s639, %s628
        $region64: #{tpu_custom_call.1} parent=47 // pred_fallthru
          _
      $region48: #{tpu_custom_call.1} parent=5 // pred_fallthru
        _
      %p645 = scmp.le.s32.totalorder 2, %s20
      // Predicated region
      $region65: #{tpu_custom_call.1} parent=5 // pred_check
        %p646 = pneg %p645
      $region66: #{tpu_custom_call.1} parent=5 // pred_check_branch
        %648 = sbr.rel (%p646) target = $region68
      $region67: #{tpu_custom_call.1} parent=5 // pred_region
        %s649 = ssub.s32 %s20, 2
        // Predicated region
        $region69: #{tpu_custom_call.1} parent=67 // pred_check
          %p650 = pneg %p228
        $region70: #{tpu_custom_call.1} parent=67 // pred_check_branch
          %652 = sbr.rel (%p650) target = $region72
        $region71: #{tpu_custom_call.1} parent=67 // pred_region
          %s653 = sand.u32 %s213, 1
          %s654 = scalar_lea.sflag [#allocation4], %s653
          %s655 = sand.u32 %s213, 1
          %s656 = smul.addr %s655, 8
          %s657 = scalar_lea.vmem [#allocation8], %s656
          %658 = dma.done %s654, 128
        $region72: #{tpu_custom_call.1} parent=67 // pred_fallthru
          _
      $region68: #{tpu_custom_call.1} parent=5 // pred_fallthru
        _
    $region6: #{tpu_custom_call.1} parent=1 // loop_footer
      %s24 = sadd.s32 1, %s20
    $region7: #{tpu_custom_call.1} parent=1 // loop_footer_branch
      %19 = sbr.rel target = $region3
    $region8: #{tpu_custom_call.1} parent=1 // loop_exit
      _
    %659 = vsyncpa [#allocation3], 1
    %s660 = scalar_lea.sflag [#allocation3], 1
    %661 = vsyncpa %s660, 1
    %662 = vsyncpa [#allocation6], 1
    %663 = vsyncpa [#allocation4], 1
    %s664 = scalar_lea.sflag [#allocation4], 1
    %665 = vsyncpa %s664, 1

// kernel: tpu_custom_call.1
$region0: #{tpu_custom_call.1}
  #allocation0 [shape = 'u32[]', space=smem, size = 0x4, offset = 0x4, fixed_abs, tag = 'smem constant byte address 0x4 - core index']
  #allocation1 [shape = 'u32[144,128]{1,0:T(1,128)}', space=vmem, size = 0x12000, scoped, tag = 'internal scratch']
  %s0 = inlined_call_operand.hbm [shape: f32[16,128], index: 0, kind: input, shape index: {}]
  %s1 = inlined_call_operand.hbm [shape: bf16[128,128], index: 1, kind: input, shape index: {}]
  %s2 = inlined_call_operand.vmem [shape: f32[1,128], index: 2, kind: input, shape index: {}]
  %s3 = inlined_call_operand.hbm [shape: bf16[128,128], index: 3, kind: input, shape index: {}]
  %s4 = inlined_call_operand.vmem [shape: f32[1,128], index: 4, kind: input, shape index: {}]
  %s5 = inlined_call_operand.vmem [shape: f32[1,128], index: 5, kind: input, shape index: {}]
  %s6 = inlined_call_operand.vmem [shape: f32[1,128], index: 6, kind: input, shape index: {}]
  %s7 = inlined_call_operand.hbm [shape: f32[16,128], index: 7, kind: output, shape index: {}]
  %s8 = sld [smem:[#allocation0]]
  $region73: #{tpu_custom_call.1} parent=0
    _
  %s10 = ssub.s32 1, %s8
  %s11 = scalar_select 0, %s10, %s8
  $region1: #{tpu_custom_call.1} parent=0
    #allocation2 [shape = 'u8[8192]{0}', space=vmem, size = 0x2000, scoped, tag = 'input window, operand 0']
    #allocation3 [shape = 's32[2]{0}', space=sflag, size = 0x8, scoped, tag = 'scoped memory for tpu_custom_call.1']
    #allocation4 [shape = 's32[2]{0}', space=sflag, size = 0x8, scoped, tag = 'scoped memory for tpu_custom_call.1']
    #allocation5 [shape = 'u8[32768]{0}', space=vmem, size = 0x8000, scoped, tag = 'input window, operand 1, single buffered']
    #allocation6 [shape = 's32[1]{0}', space=sflag, size = 0x4, scoped, tag = 'scoped memory for tpu_custom_call.1']
    #allocation7 [shape = 'u8[32768]{0}', space=vmem, size = 0x8000, scoped, tag = 'input window, operand 3, single buffered']
    #allocation8 [shape = 'u8[8192]{0}', space=vmem, size = 0x2000, scoped, tag = 'output window, operand 0']
    %12 = vsyncpa [#allocation3], 0
    %s13 = scalar_lea.sflag [#allocation3], 1
    %14 = vsyncpa %s13, 0
    %15 = vsyncpa [#allocation6], 0
    %16 = vsyncpa [#allocation4], 0
    %s17 = scalar_lea.sflag [#allocation4], 1
    %18 = vsyncpa %s17, 0
    loop: start=0, step=1, limit=4
    $region2: #{tpu_custom_call.1} parent=1 // loop_pre_header
      _
    $region3: #{tpu_custom_call.1} parent=1 // loop_header
      %s20 = sphi 0, %s24
      %p21 = scmp.ge.s32.totalorder %s20, 4
      %s27 = sphi 0, %s39
      %s28 = sphi 0, %s35
      %s29 = sphi 0, %s27
      %s30 = sphi 0, %s28
      %s31 = sphi 0, %s29
      %s32 = sphi 0, %s30
      %s42 = sphi 0, %s44
      %s45 = sphi 0, %s42
      %s46 = sphi 0, %s45
      %s62 = sphi 0, %s46
      %s68 = sphi 0, %s70
      %s71 = sphi 0, %s68
      %s72 = sphi 0, %s71
      %s88 = sphi 0, %s72
      %s94 = sphi 0, %s96
      %s97 = sphi 0, %s94
      %s98 = sphi 0, %s97
      %s114 = sphi 0, %s98
      %s120 = sphi 0, %s122
      %s123 = sphi 0, %s120
      %s124 = sphi 0, %s123
      %s140 = sphi 0, %s124
      %s144 = sphi 0, %s144
      %s146 = sphi 0, %s144
      %s147 = sphi 0, %s146
      %s161 = sphi 0, %s147
      %s165 = sphi 0, %s165
      %s167 = sphi 0, %s165
      %s168 = sphi 0, %s167
      %s182 = sphi 0, %s168
      %s186 = sphi 0, %s186
      %s188 = sphi 0, %s186
      %s189 = sphi 0, %s188
      %s203 = sphi 0, %s189
      %s209 = sphi 0, %s211
      %s212 = sphi 0, %s209
      %s213 = sphi 0, %s212
      %s229 = sphi 0, %s213
    $region4: #{tpu_custom_call.1} parent=1 // loop_header_branch
      %23 = sbr.rel (%p21) target = $region8
    $region5: #{tpu_custom_call.1} parent=1 // loop_body
      %s25 = ssub.s32 %s20, 1
      %s26 = ssub.s32 %s20, 2
      %s33 = sadd.s32 1, %s28
      %p34 = scmp.ge.s32.totalorder %s33, 1
      %s35 = scalar_select %p34, 0, %s33
      %s36 = sadd.s32 1, %s27
      %s37 = scalar_select %p34, %s36, %s27
      %p38 = scmp.ge.s32.totalorder %s37, 2
      %s39 = scalar_select %p38, 0, %s37
      %s40 = ssub.s32 %s27, %s39
      %p41 = scmp.eq.s32.totalorder %s40, 0
      %s43 = sadd.s32 %s42, 1
      %s44 = scalar_select %p41, %s42, %s43
      %p47 = pneg %p41
      %p48 = scmp.eq.s32.totalorder %s20, 1
      %p49 = por %p47, %p48
      %p50 = scmp.ne.s32.totalorder %s42, %s45
      %p51 = scmp.eq.s32.totalorder %s20, 0
      %p52 = por %p50, %p51
      %p53 = scmp.ne.s32.totalorder %s42, %s45
      %p54 = scmp.eq.s32.totalorder %s25, 1
      %p55 = por %p53, %p54
      %p56 = scmp.ne.s32.totalorder %s45, %s46
      %p57 = scmp.eq.s32.totalorder %s25, 0
      %p58 = por %p56, %p57
      %p59 = scmp.ne.s32.totalorder %s45, %s46
      %p60 = scmp.eq.s32.totalorder %s26, 1
      %p61 = por %p59, %p60
      %p63 = scmp.ne.s32.totalorder %s46, %s62
      %p64 = scmp.eq.s32.totalorder %s26, 0
      %p65 = por %p63, %p64
      %s66 = ssub.s32 %s28, %s35
      %p67 = scmp.eq.s32.totalorder %s66, 0
      %s69 = sadd.s32 %s68, 1
      %s70 = scalar_select %p67, %s68, %s69
      %p73 = pneg %p67
      %p74 = scmp.eq.s32.totalorder %s20, 1
      %p75 = por %p73, %p74
      %p76 = scmp.ne.s32.totalorder %s68, %s71
      %p77 = scmp.eq.s32.totalorder %s20, 0
      %p78 = por %p76, %p77
      %p79 = scmp.ne.s32.totalorder %s68, %s71
      %p80 = scmp.eq.s32.totalorder %s25, 1
      %p81 = por %p79, %p80
      %p82 = scmp.ne.s32.totalorder %s71, %s72
      %p83 = scmp.eq.s32.totalorder %s25, 0
      %p84 = por %p82, %p83
      %p85 = scmp.ne.s32.totalorder %s71, %s72
      %p86 = scmp.eq.s32.totalorder %s26, 1
      %p87 = por %p85, %p86
      %p89 = scmp.ne.s32.totalorder %s72, %s88
      %p90 = scmp.eq.s32.totalorder %s26, 0
      %p91 = por %p89, %p90
      %s92 = ssub.s32 %s28, %s35
      %p93 = scmp.eq.s32.totalorder %s92, 0
      %s95 = sadd.s32 %s94, 1
      %s96 = scalar_select %p93, %s94, %s95
      %p99 = pneg %p93
      %p100 = scmp.eq.s32.totalorder %s20, 1
      %p101 = por %p99, %p100
      %p102 = scmp.ne.s32.totalorder %s94, %s97
      %p103 = scmp.eq.s32.totalorder %s20, 0
      %p104 = por %p102, %p103
      %p105 = scmp.ne.s32.totalorder %s94, %s97
      %p106 = scmp.eq.s32.totalorder %s25, 1
      %p107 = por %p105, %p106
      %p108 = scmp.ne.s32.totalorder %s97, %s98
      %p109 = scmp.eq.s32.totalorder %s25, 0
      %p110 = por %p108, %p109
      %p111 = scmp.ne.s32.totalorder %s97, %s98
      %p112 = scmp.eq.s32.totalorder %s26, 1
      %p113 = por %p111, %p112
      %p115 = scmp.ne.s32.totalorder %s98, %s114
      %p116 = scmp.eq.s32.totalorder %s26, 0
      %p117 = por %p115, %p116
      %s118 = ssub.s32 %s28, %s35
      %p119 = scmp.eq.s32.totalorder %s118, 0
      %s121 = sadd.s32 %s120, 1
      %s122 = scalar_select %p119, %s120, %s121
      %p125 = pneg %p119
      %p126 = scmp.eq.s32.totalorder %s20, 1
      %p127 = por %p125, %p126
      %p128 = scmp.ne.s32.totalorder %s120, %s123
      %p129 = scmp.eq.s32.totalorder %s20, 0
      %p130 = por %p128, %p129
      %p131 = scmp.ne.s32.totalorder %s120, %s123
      %p132 = scmp.eq.s32.totalorder %s25, 1
      %p133 = por %p131, %p132
      %p134 = scmp.ne.s32.totalorder %s123, %s124
      %p135 = scmp.eq.s32.totalorder %s25, 0
      %p136 = por %p134, %p135
      %p137 = scmp.ne.s32.totalorder %s123, %s124
      %p138 = scmp.eq.s32.totalorder %s26, 1
      %p139 = por %p137, %p138
      %p141 = scmp.ne.s32.totalorder %s124, %s140
      %p142 = scmp.eq.s32.totalorder %s26, 0
      %p143 = por %p141, %p142
      %s145 = sadd.s32 %s144, 1
      %p148 = scmp.eq.s32.totalorder %s20, 1
      %p149 = scmp.ne.s32.totalorder %s144, %s146
      %p150 = scmp.eq.s32.totalorder %s20, 0
      %p151 = por %p149, %p150
      %p152 = scmp.ne.s32.totalorder %s144, %s146
      %p153 = scmp.eq.s32.totalorder %s25, 1
      %p154 = por %p152, %p153
      %p155 = scmp.ne.s32.totalorder %s146, %s147
      %p156 = scmp.eq.s32.totalorder %s25, 0
      %p157 = por %p155, %p156
      %p158 = scmp.ne.s32.totalorder %s146, %s147
      %p159 = scmp.eq.s32.totalorder %s26, 1
      %p160 = por %p158, %p159
      %p162 = scmp.ne.s32.totalorder %s147, %s161
      %p163 = scmp.eq.s32.totalorder %s26, 0
      %p164 = por %p162, %p163
      %s166 = sadd.s32 %s165, 1
      %p169 = scmp.eq.s32.totalorder %s20, 1
      %p170 = scmp.ne.s32.totalorder %s165, %s167
      %p171 = scmp.eq.s32.totalorder %s20, 0
      %p172 = por %p170, %p171
      %p173 = scmp.ne.s32.totalorder %s165, %s167
      %p174 = scmp.eq.s32.totalorder %s25, 1
      %p175 = por %p173, %p174
      %p176 = scmp.ne.s32.totalorder %s167, %s168
      %p177 = scmp.eq.s32.totalorder %s25, 0
      %p178 = por %p176, %p177
      %p179 = scmp.ne.s32.totalorder %s167, %s168
      %p180 = scmp.eq.s32.totalorder %s26, 1
      %p181 = por %p179, %p180
      %p183 = scmp.ne.s32.totalorder %s168, %s182
      %p184 = scmp.eq.s32.totalorder %s26, 0
      %p185 = por %p183, %p184
      %s187 = sadd.s32 %s186, 1
      %p190 = scmp.eq.s32.totalorder %s20, 1
      %p191 = scmp.ne.s32.totalorder %s186, %s188
      %p192 = scmp.eq.s32.totalorder %s20, 0
      %p193 = por %p191, %p192
      %p194 = scmp.ne.s32.totalorder %s186, %s188
      %p195 = scmp.eq.s32.totalorder %s25, 1
      %p196 = por %p194, %p195
      %p197 = scmp.ne.s32.totalorder %s188, %s189
      %p198 = scmp.eq.s32.totalorder %s25, 0
      %p199 = por %p197, %p198
      %p200 = scmp.ne.s32.totalorder %s188, %s189
      %p201 = scmp.eq.s32.totalorder %s26, 1
      %p202 = por %p200, %p201
      %p204 = scmp.ne.s32.totalorder %s189, %s203
      %p205 = scmp.eq.s32.totalorder %s26, 0
      %p206 = por %p204, %p205
      %s207 = ssub.s32 %s27, %s39
      %p208 = scmp.eq.s32.totalorder %s207, 0
      %s210 = sadd.s32 %s209, 1
      %s211 = scalar_select %p208, %s209, %s210
      %p214 = pneg %p208
      %p215 = scmp.eq.s32.totalorder %s20, 1
      %p216 = por %p214, %p215
      %p217 = scmp.ne.s32.totalorder %s209, %s212
      %p218 = scmp.eq.s32.totalorder %s20, 0
      %p219 = por %p217, %p218
      %p220 = scmp.ne.s32.totalorder %s209, %s212
      %p221 = scmp.eq.s32.totalorder %s25, 1
      %p222 = por %p220, %p221
      %p223 = scmp.ne.s32.totalorder %s212, %s213
      %p224 = scmp.eq.s32.totalorder %s25, 0
      %p225 = por %p223, %p224
      %p226 = scmp.ne.s32.totalorder %s212, %s213
      %p227 = scmp.eq.s32.totalorder %s26, 1
      %p228 = por %p226, %p227
      %p230 = scmp.ne.s32.totalorder %s213, %s229
      %p231 = scmp.eq.s32.totalorder %s26, 0
      %p232 = por %p230, %p231
      %p233 = scmp.le.s32.totalorder 1, %s20
      %p234 = scmp.lt.s32.totalorder %s20, 3
      %p235 = pnand %p233, %p234
      %p236 = pneg %p235
      // Predicated region
      $region9: #{tpu_custom_call.1} parent=5 // pred_check
        _
      $region10: #{tpu_custom_call.1} parent=5 // pred_check_branch
        %238 = sbr.rel (%p235) target = $region12
      $region11: #{tpu_custom_call.1} parent=5 // pred_region
        %s239 = ssub.s32 %s20, 1
        // Predicated region
        $region13: #{tpu_custom_call.1} parent=11 // pred_check
          %p240 = pneg %p84
        $region14: #{tpu_custom_call.1} parent=11 // pred_check_branch
          %242 = sbr.rel (%p240) target = $region16
        $region15: #{tpu_custom_call.1} parent=11 // pred_region
          %s244 = ssub.s32 1024, 1024
          %245 = vsyncadd [#allocation6], %s244
          %s246 = smul.addr %s30, 64
          %s247 = scalar_lea.hbm %s1, %s246
          %s248 = sshll.u32 [#allocation5], 4
          %s249 = int_to_ptr.vmem [resolvable:$true] %s248
          %254 = dma.hbm_to_vmem [thread:$0]  %s247, 1024, %s249, [#allocation6], 64, 64, 4
        $region16: #{tpu_custom_call.1} parent=11 // pred_fallthru
          _
        // Predicated region
        $region17: #{tpu_custom_call.1} parent=11 // pred_check
          %p255 = pneg %p110
        $region18: #{tpu_custom_call.1} parent=11 // pred_check_branch
          %257 = sbr.rel (%p255) target = $region20
        $region19: #{tpu_custom_call.1} parent=11 // pred_region
          %p258 = scmp.lt.s32.totalorder %s30, 0
          %s259 = scalar_select %p258, %s30, 0
          %s260 = scalar_lea.vmem %s2, %s259
        $region20: #{tpu_custom_call.1} parent=11 // pred_fallthru
          _
        // Predicated region
        $region21: #{tpu_custom_call.1} parent=11 // pred_check
          %p261 = pneg %p136
        $region22: #{tpu_custom_call.1} parent=11 // pred_check_branch
          %263 = sbr.rel (%p261) target = $region24
        $region23: #{tpu_custom_call.1} parent=11 // pred_region
          %s264 = smul.u32 16, %s30
          %s266 = ssub.s32 1024, 1024
          %267 = vsyncadd [#allocation6], %s266
          %s268 = smul.addr %s264, 64
          %s269 = scalar_lea.hbm %s3, %s268
          %s270 = sshll.u32 [#allocation7], 4
          %s271 = int_to_ptr.vmem [resolvable:$true] %s270
          %276 = dma.hbm_to_vmem [thread:$0]  %s269, 1024, %s271, [#allocation6], 64, 64, 4
        $region24: #{tpu_custom_call.1} parent=11 // pred_fallthru
          _
        // Predicated region
        $region25: #{tpu_custom_call.1} parent=11 // pred_check
          %p277 = pneg %p157
        $region26: #{tpu_custom_call.1} parent=11 // pred_check_branch
          %279 = sbr.rel (%p277) target = $region28
        $region27: #{tpu_custom_call.1} parent=11 // pred_region
          _
        $region28: #{tpu_custom_call.1} parent=11 // pred_fallthru
          _
        // Predicated region
        $region29: #{tpu_custom_call.1} parent=11 // pred_check
          %p280 = pneg %p178
        $region30: #{tpu_custom_call.1} parent=11 // pred_check_branch
          %282 = sbr.rel (%p280) target = $region32
        $region31: #{tpu_custom_call.1} parent=11 // pred_region
          _
        $region32: #{tpu_custom_call.1} parent=11 // pred_fallthru
          _
        // Predicated region
        $region33: #{tpu_custom_call.1} parent=11 // pred_check
          %p283 = pneg %p199
        $region34: #{tpu_custom_call.1} parent=11 // pred_check_branch
          %285 = sbr.rel (%p283) target = $region36
        $region35: #{tpu_custom_call.1} parent=11 // pred_region
          _
        $region36: #{tpu_custom_call.1} parent=11 // pred_fallthru
          _
      $region12: #{tpu_custom_call.1} parent=5 // pred_fallthru
        _
      %p286 = scmp.lt.s32.totalorder %s20, 2
      // Predicated region
      $region37: #{tpu_custom_call.1} parent=5 // pred_check
        %p287 = pneg %p286
      $region38: #{tpu_custom_call.1} parent=5 // pred_check_branch
        %289 = sbr.rel (%p287) target = $region40
      $region39: #{tpu_custom_call.1} parent=5 // pred_region
        // Predicated region
        $region41: #{tpu_custom_call.1} parent=39 // pred_check
          %p290 = pneg %p52
        $region42: #{tpu_custom_call.1} parent=39 // pred_check_branch
          %292 = sbr.rel (%p290) target = $region44
        $region43: #{tpu_custom_call.1} parent=39 // pred_region
          %s293 = sand.u32 %s42, 1
          %s294 = scalar_lea.sflag [#allocation3], %s293
          %s295 = sand.u32 %s42, 1
          %s296 = smul.addr %s295, 8
          %s297 = scalar_lea.vmem [#allocation2], %s296
          %s299 = ssub.s32 128, 128
          %300 = vsyncadd %s294, %s299
          %s301 = smul.addr %s27, 128
          %s302 = scalar_lea.hbm %s0, %s301
          %s304 = sshll.u32 %s297, 4
          %s305 = int_to_ptr.vmem [resolvable:$true] %s304
          %307 = dma.hbm_to_vmem [thread:$0]  %s302, 128, %s305, %s294
        $region44: #{tpu_custom_call.1} parent=39 // pred_fallthru
          _
      $region40: #{tpu_custom_call.1} parent=5 // pred_fallthru
        _
      %p308 = scmp.le.s32.totalorder 1, %s20
      %p309 = scmp.lt.s32.totalorder %s20, 3
      %p310 = pnand %p308, %p309
      %p311 = pneg %p310
      // Predicated region
      $region45: #{tpu_custom_call.1} parent=5 // pred_check
        _
      $region46: #{tpu_custom_call.1} parent=5 // pred_check_branch
        %313 = sbr.rel (%p310) target = $region48
      $region47: #{tpu_custom_call.1} parent=5 // pred_region
        %s314 = ssub.s32 %s20, 1
        %s315 = sand.u32 %s45, 1
        %s316 = scalar_lea.sflag [#allocation3], %s315
        %s317 = sand.u32 %s45, 1
        %s318 = smul.addr %s317, 8
        %s319 = scalar_lea.vmem [#allocation2], %s318
        // Predicated region
        $region49: #{tpu_custom_call.1} parent=47 // pred_check
          %p320 = pneg %p58
        $region50: #{tpu_custom_call.1} parent=47 // pred_check_branch
          %322 = sbr.rel (%p320) target = $region52
        $region51: #{tpu_custom_call.1} parent=47 // pred_region
          %323 = dma.done %s316, 128
        $region52: #{tpu_custom_call.1} parent=47 // pred_fallthru
          _
        // Predicated region
        $region53: #{tpu_custom_call.1} parent=47 // pred_check
          %p324 = pneg %p84
        $region54: #{tpu_custom_call.1} parent=47 // pred_check_branch
          %326 = sbr.rel (%p324) target = $region56
        $region55: #{tpu_custom_call.1} parent=47 // pred_region
          %327 = dma.done [#allocation6], 1024
        $region56: #{tpu_custom_call.1} parent=47 // pred_fallthru
          _
        // Predicated region
        $region57: #{tpu_custom_call.1} parent=47 // pred_check
          %p328 = pneg %p136
        $region58: #{tpu_custom_call.1} parent=47 // pred_check_branch
          %330 = sbr.rel (%p328) target = $region60
        $region59: #{tpu_custom_call.1} parent=47 // pred_region
          %331 = dma.done [#allocation6], 1024
        $region60: #{tpu_custom_call.1} parent=47 // pred_fallthru
          _
        %s332 = sand.u32 %s45, 1
        %s333 = scalar_lea.sflag [#allocation3], %s332
        %s334 = sand.u32 %s45, 1
        %s335 = smul.addr %s334, 8
        %s336 = scalar_lea.vmem [#allocation2], %s335
        %p337 = pneg %p58
        %p338 = pneg %p55
        %p339 = pneg %p84
        %p340 = pneg %p81
        %p341 = scmp.lt.s32.totalorder %s30, 0
        %s342 = scalar_select %p341, %s30, 0
        %s343 = scalar_lea.vmem %s2, %s342
        %p344 = pneg %p110
        %p345 = pneg %p107
        %p346 = pneg %p136
        %p347 = pneg %p133
        %p348 = pneg %p157
        %p349 = pneg %p154
        %p350 = pneg %p178
        %p351 = pneg %p175
        %p352 = pneg %p199
        %p353 = pneg %p196
        %p354 = pneg %p225
        %p355 = pneg %p222
        %s356 = sand.u32 %s212, 1
        %s357 = scalar_lea.sflag [#allocation4], %s356
        %s358 = sand.u32 %s212, 1
        %s359 = smul.addr %s358, 8
        %s360 = scalar_lea.vmem [#allocation8], %s359
        %p361 = scmp.lt.s32.totalorder %s30, 0
        %s362 = scalar_select %p361, %s30, 0
        %s363 = scalar_lea.vmem %s2, %s362
        %s364 = smul.u32 16, %s30
        %v366 = vld [vmem:[%s319] sm:$0xff]
        %v367 = vpack.c.bf16 %v366, %v366
        %v368 = vld [vmem:[#allocation5] sm:$0xf]
        %v369 = vld [vmem:[#allocation5 + $0x4] sm:$0xf]
        %v370 = vld [vmem:[#allocation5 + $0x8] sm:$0xf]
        %v371 = vld [vmem:[#allocation5 + $0xc] sm:$0xf]
        %v372 = vld [vmem:[#allocation5 + $0x10] sm:$0xf]
        %v373 = vld [vmem:[#allocation5 + $0x14] sm:$0xf]
        %v374 = vld [vmem:[#allocation5 + $0x18] sm:$0xf]
        %v375 = vld [vmem:[#allocation5 + $0x1c] sm:$0xf]
        %v376 = vld [vmem:[#allocation5 + $0x20] sm:$0xf]
        %v377 = vld [vmem:[#allocation5 + $0x24] sm:$0xf]
        %v378 = vld [vmem:[#allocation5 + $0x28] sm:$0xf]
        %v379 = vld [vmem:[#allocation5 + $0x2c] sm:$0xf]
        %v380 = vld [vmem:[#allocation5 + $0x30] sm:$0xf]
        %v381 = vld [vmem:[#allocation5 + $0x34] sm:$0xf]
        %v382 = vld [vmem:[#allocation5 + $0x38] sm:$0xf]
        %v383 = vld [vmem:[#allocation5 + $0x3c] sm:$0xf]
        %v384 = vld [vmem:[%s363] sm:$0x1]
        %v386 = vlaneseq
        %v387 = vshrl.u32 %v386, 7
        %v388 = vsub.s32 0, %v387
        %v389 = vrot.slane %v384, %v388
        %v407 = vunpack.c.l.b16 %v368
        %v408 = vunpack.c.l.b16 %v369
        %v409 = vunpack.c.l.b16 %v370
        %v410 = vunpack.c.l.b16 %v371
        %v411 = vunpack.c.l.b16 %v372
        %v412 = vunpack.c.l.b16 %v373
        %v413 = vunpack.c.l.b16 %v374
        %v414 = vunpack.c.l.b16 %v375
        %v415 = vunpack.c.l.b16 %v376
        %v416 = vunpack.c.l.b16 %v377
        %v417 = vunpack.c.l.b16 %v378
        %v418 = vunpack.c.l.b16 %v379
        %v419 = vunpack.c.l.b16 %v380
        %v420 = vunpack.c.l.b16 %v381
        %v421 = vunpack.c.l.b16 %v382
        %v422 = vunpack.c.l.b16 %v383
        %v423 = vpack.c.b16 %v408, %v407
        %v424 = vpack.c.b16 %v410, %v409
        %v425 = vpack.c.b16 %v412, %v411
        %v426 = vpack.c.b16 %v414, %v413
        %v427 = vpack.c.b16 %v416, %v415
        %v428 = vpack.c.b16 %v418, %v417
        %v429 = vpack.c.b16 %v420, %v419
        %v430 = vpack.c.b16 %v422, %v421
        %439 = vmatprep.subr.bf16.mxu0 0
        %440 = vmatpush1.bf16.msra.mxu0 %v423
        %441 = vmatprep.subr.bf16.mxu0 0
        %442 = vmatpush1.bf16.msra.mxu0 %v424
        %443 = vmatprep.subr.bf16.mxu0 0
        %444 = vmatpush1.bf16.msra.mxu0 %v425
        %445 = vmatprep.subr.bf16.mxu0 0
        %446 = vmatpush1.bf16.msra.mxu0 %v426
        %447 = vmatprep.subr.bf16.mxu0 0
        %448 = vmatpush1.bf16.msra.mxu0 %v427
        %449 = vmatprep.subr.bf16.mxu0 0
        %450 = vmatpush1.bf16.msra.mxu0 %v428
        %451 = vmatprep.subr.bf16.mxu0 0
        %452 = vmatpush1.bf16.msra.mxu0 %v429
        %453 = vmatprep.subr.bf16.mxu0 0
        %454 = vmatpush1.bf16.msra.mxu0 %v430
        %455 = vmatprep.subr.bf16.mxu0 0
        %456 = vmatpush1.bf16.msra.mxu0 0
        %457 = vmatprep.subr.bf16.mxu0 0
        %458 = vmatpush1.bf16.msra.mxu0 0
        %459 = vmatprep.subr.bf16.mxu0 0
        %460 = vmatpush1.bf16.msra.mxu0 0
        %461 = vmatprep.subr.bf16.mxu0 0
        %462 = vmatpush1.bf16.msra.mxu0 0
        %463 = vmatprep.subr.bf16.mxu0 0
        %464 = vmatpush1.bf16.msra.mxu0 0
        %465 = vmatprep.subr.bf16.mxu0 0
        %466 = vmatpush1.bf16.msra.mxu0 0
        %467 = vmatprep.subr.bf16.mxu0 0
        %468 = vmatpush1.bf16.msra.mxu0 0
        %469 = vmatprep.subr.bf16.mxu0 0
        %470 = vmatpush1.bf16.msra.mxu0 0
        %471 = vmatprep.mubr.bf16.mxu0 0
        %472 = vmatmul.mubr.bf16.gmra.mrb[0].mxu0 %v367
        %v473 = vpop.f32.mrb[0].mxu0
        %v474 = vadd.f32 %v389, %v473
        %v475 = vpop.f32.mrb[0].mxu0
        %v476 = vpop.f32.mrb[0].mxu0
        %v477 = vpop.f32.mrb[0].mxu0
        %478 = vdwg.mxu0
        %v479 = vmax.f32 %v474, 0.0
        %v480 = vpack.c.bf16 %v479, %v479
        %v481 = vld [vmem:[#allocation7] sm:$0xf]
        %v482 = vld [vmem:[#allocation7 + $0x4] sm:$0xf]
        %v483 = vld [vmem:[#allocation7 + $0x8] sm:$0xf]
        %v484 = vld [vmem:[#allocation7 + $0xc] sm:$0xf]
        %v485 = vld [vmem:[#allocation7 + $0x10] sm:$0xf]
        %v486 = vld [vmem:[#allocation7 + $0x14] sm:$0xf]
        %v487 = vld [vmem:[#allocation7 + $0x18] sm:$0xf]
        %v488 = vld [vmem:[#allocation7 + $0x1c] sm:$0xf]
        %v489 = vld [vmem:[#allocation7 + $0x20] sm:$0xf]
        %v490 = vld [vmem:[#allocation7 + $0x24] sm:$0xf]
        %v491 = vld [vmem:[#allocation7 + $0x28] sm:$0xf]
        %v492 = vld [vmem:[#allocation7 + $0x2c] sm:$0xf]
        %v493 = vld [vmem:[#allocation7 + $0x30] sm:$0xf]
        %v494 = vld [vmem:[#allocation7 + $0x34] sm:$0xf]
        %v495 = vld [vmem:[#allocation7 + $0x38] sm:$0xf]
        %v496 = vld [vmem:[#allocation7 + $0x3c] sm:$0xf]
        %v497 = vld [vmem:[%s4] sm:$0x1]
        %v499 = vlaneseq
        %v500 = vshrl.u32 %v499, 7
        %v501 = vsub.s32 0, %v500
        %v502 = vrot.slane %v497, %v501
        %v520 = vunpack.c.l.b16 %v481
        %v521 = vunpack.c.l.b16 %v482
        %v522 = vunpack.c.l.b16 %v483
        %v523 = vunpack.c.l.b16 %v484
        %v524 = vunpack.c.l.b16 %v485
        %v525 = vunpack.c.l.b16 %v486
        %v526 = vunpack.c.l.b16 %v487
        %v527 = vunpack.c.l.b16 %v488
        %v528 = vunpack.c.l.b16 %v489
        %v529 = vunpack.c.l.b16 %v490
        %v530 = vunpack.c.l.b16 %v491
        %v531 = vunpack.c.l.b16 %v492
        %v532 = vunpack.c.l.b16 %v493
        %v533 = vunpack.c.l.b16 %v494
        %v534 = vunpack.c.l.b16 %v495
        %v535 = vunpack.c.l.b16 %v496
        %v536 = vpack.c.b16 %v521, %v520
        %v537 = vpack.c.b16 %v523, %v522
        %v538 = vpack.c.b16 %v525, %v524
        %v539 = vpack.c.b16 %v527, %v526
        %v540 = vpack.c.b16 %v529, %v528
        %v541 = vpack.c.b16 %v531, %v530
        %v542 = vpack.c.b16 %v533, %v532
        %v543 = vpack.c.b16 %v535, %v534
        %552 = vmatprep.subr.bf16.mxu0 0
        %553 = vmatpush1.bf16.msra.mxu0 %v536
        %554 = vmatprep.subr.bf16.mxu0 0
        %555 = vmatpush1.bf16.msra.mxu0 %v537
        %556 = vmatprep.subr.bf16.mxu0 0
        %557 = vmatpush1.bf16.msra.mxu0 %v538
        %558 = vmatprep.subr.bf16.mxu0 0
        %559 = vmatpush1.bf16.msra.mxu0 %v539
        %560 = vmatprep.subr.bf16.mxu0 0
        %561 = vmatpush1.bf16.msra.mxu0 %v540
        %562 = vmatprep.subr.bf16.mxu0 0
        %563 = vmatpush1.bf16.msra.mxu0 %v541
        %564 = vmatprep.subr.bf16.mxu0 0
        %565 = vmatpush1.bf16.msra.mxu0 %v542
        %566 = vmatprep.subr.bf16.mxu0 0
        %567 = vmatpush1.bf16.msra.mxu0 %v543
        %568 = vmatprep.subr.bf16.mxu0 0
        %569 = vmatpush1.bf16.msra.mxu0 0
        %570 = vmatprep.subr.bf16.mxu0 0
        %571 = vmatpush1.bf16.msra.mxu0 0
        %572 = vmatprep.subr.bf16.mxu0 0
        %573 = vmatpush1.bf16.msra.mxu0 0
        %574 = vmatprep.subr.bf16.mxu0 0
        %575 = vmatpush1.bf16.msra.mxu0 0
        %576 = vmatprep.subr.bf16.mxu0 0
        %577 = vmatpush1.bf16.msra.mxu0 0
        %578 = vmatprep.subr.bf16.mxu0 0
        %579 = vmatpush1.bf16.msra.mxu0 0
        %580 = vmatprep.subr.bf16.mxu0 0
        %581 = vmatpush1.bf16.msra.mxu0 0
        %582 = vmatprep.subr.bf16.mxu0 0
        %583 = vmatpush1.bf16.msra.mxu0 0
        %584 = vmatprep.mubr.bf16.mxu0 0
        %585 = vmatmul.mubr.bf16.gmra.mrb[0].mxu0 %v480
        %v586 = vpop.f32.mrb[0].mxu0
        %v587 = vadd.f32 %v502, %v586
        %v588 = vpop.f32.mrb[0].mxu0
        %v589 = vpop.f32.mrb[0].mxu0
        %v590 = vpop.f32.mrb[0].mxu0
        %591 = vdwg.mxu0
        %v592 = vadd.f32 %v587, %v366
        %593 = vadd.xlane.f32.xlu0 %v592
        %v594 = vpop.xlane.xlu0 %593
        %v595 = vmul.f32 %v594, 0.03125
        %v596 = vlaneseq
        %v597 = vand.u32 %v596, 127
        %vm598 = vcmp.lt.s32.totalorder %v597, 32
        %v599 = vsub.f32 %v592, %v595
        %v600 = vsel %vm598, 1, 0
        %vm601 = vcmp.eq.s32.totalorder %v600, 1
        %v602 = vsel %vm601, %v599, 0.0
        %v603 = vmul.f32 %v602, %v602
        %604 = vadd.xlane.f32.xlu0 %v603
        %v605 = vpop.xlane.xlu0 %604
        %v606 = vmul.f32 %v605, 0.03125
        %v607 = vadd.f32 %v606, 1e-05
        %v608 = vrsqrt.pop %v607
        %v609 = vmul.f32 %v602, %v608
        %v610 = vld [vmem:[%s5] sm:$0x1]
        %v612 = vlaneseq
        %v613 = vshrl.u32 %v612, 7
        %v614 = vsub.s32 0, %v613
        %v615 = vrot.slane %v610, %v614
        %v617 = vmul.f32 %v609, %v615
        %v618 = vld [vmem:[%s6] sm:$0x1]
        %v620 = vlaneseq
        %v621 = vshrl.u32 %v620, 7
        %v622 = vsub.s32 0, %v621
        %v623 = vrot.slane %v618, %v622
        %v625 = vadd.f32 %v617, %v623
        %626 = vst [vmem:[%s360] sm:$0xff] %v625
        %s627 = sand.u32 %s212, 1
        %s628 = scalar_lea.sflag [#allocation4], %s627
        %s629 = sand.u32 %s212, 1
        %s630 = smul.addr %s629, 8
        %s631 = scalar_lea.vmem [#allocation8], %s630
        // Predicated region
        $region61: #{tpu_custom_call.1} parent=47 // pred_check
          %p632 = pneg %p222
        $region62: #{tpu_custom_call.1} parent=47 // pred_check_branch
          %634 = sbr.rel (%p632) target = $region64
        $region63: #{tpu_custom_call.1} parent=47 // pred_region
          %s636 = ssub.s32 128, 128
          %637 = vsyncadd %s628, %s636
          %s638 = smul.addr %s29, 128
          %s639 = scalar_lea.hbm %s7, %s638
          %s641 = sshll.u32 %s631, 4
          %s642 = int_to_ptr.vmem [resolvable:$true] %s641
          %644 = dma.vmem_to_hbm [thread:$0]  %s642, 128, %s639, %s628
        $region64: #{tpu_custom_call.1} parent=47 // pred_fallthru
          _
      $region48: #{tpu_custom_call.1} parent=5 // pred_fallthru
        _
      %p645 = scmp.le.s32.totalorder 2, %s20
      // Predicated region
      $region65: #{tpu_custom_call.1} parent=5 // pred_check
        %p646 = pneg %p645
      $region66: #{tpu_custom_call.1} parent=5 // pred_check_branch
        %648 = sbr.rel (%p646) target = $region68
      $region67: #{tpu_custom_call.1} parent=5 // pred_region
        %s649 = ssub.s32 %s20, 2
        // Predicated region
        $region69: #{tpu_custom_call.1} parent=67 // pred_check
          %p650 = pneg %p228
        $region70: #{tpu_custom_call.1} parent=67 // pred_check_branch
          %652 = sbr.rel (%p650) target = $region72
        $region71: #{tpu_custom_call.1} parent=67 // pred_region
          %s653 = sand.u32 %s213, 1
          %s654 = scalar_lea.sflag [#allocation4], %s653
          %s655 = sand.u32 %s213, 1
          %s656 = smul.addr %s655, 8
          %s657 = scalar_lea.vmem [#allocation8], %s656
          %658 = dma.done %s654, 128
        $region72: #{tpu_custom_call.1} parent=67 // pred_fallthru
          _
      $region68: #{tpu_custom_call.1} parent=5 // pred_fallthru
        _
    $region6: #{tpu_custom_call.1} parent=1 // loop_footer
      %s24 = sadd.s32 1, %s20
    $region7: #{tpu_custom_call.1} parent=1 // loop_footer_branch
      %19 = sbr.rel target = $region3
    $region8: #{tpu_custom_call.1} parent=1 // loop_exit
      _
    %659 = vsyncpa [#allocation3], 1
    %s660 = scalar_lea.sflag [#allocation3], 1
    %661 = vsyncpa %s660, 1
    %662 = vsyncpa [#allocation6], 1
    %663 = vsyncpa [#allocation4], 1
    %s664 = scalar_lea.sflag [#allocation4], 1
    %665 = vsyncpa %s664, 1

</llo_original>
